<compile_context>
chip_gen: v6e
topology: v6e:2x2x1
jax: 0.10.0
libtpu: 0.0.40
codegen_flags: <defaults>
</compile_context>

<pallas_src>
import functools

import jax
import jax.numpy as jnp
from jax.experimental import pallas as pl
from jax.experimental.pallas import tpu as pltpu

LANE = 128
RESIDENT_X_BYTES = 16 << 20   # keep resident X well under v7x's 64 MiB VMEM


def _round_up(x, m):
    return (x + m - 1) // m * m


def _pad2d(x, rows, cols):
    r, c = x.shape
    return jnp.pad(x, ((0, rows - r), (0, cols - c)))


def _sage_layer_kernel(apply_relu, resident_x, tile, *refs):
    if resident_x:
        (a_ref, x_ref, inv_deg_ref, wl_ref, wr_ref, b_ref,
         o_ref, acc_ref, root_ref) = refs
    else:
        (a_ref, xk_ref, xi_ref, inv_deg_ref, wl_ref, wr_ref, b_ref,
         o_ref, acc_ref, root_ref) = refs

    i = pl.program_id(0)
    k = pl.program_id(1)

    @pl.when(k == 0)
    def _():
        acc_ref[...] = jnp.zeros_like(acc_ref)
        # Hoisted root transform: runs on the first reduction step instead of
        # serially lengthening the final k step after the last A-tile DMA.
        if resident_x:
            xi = x_ref[pl.ds(pl.multiple_of(i * tile, tile), tile), :]
        else:
            xi = xi_ref[...]
        root_ref[...] = (
            jnp.dot(xi, wr_ref[...], preferred_element_type=jnp.float32)
            + b_ref[...])

    if resident_x:
        xk = x_ref[pl.ds(pl.multiple_of(k * tile, tile), tile), :]
    else:
        xk = xk_ref[...]

    # Neighbor-sum accumulation on the fast bf16 MXU path:
    # int8 edge counts -> bf16 (exact), f32 accumulation.
    acc_ref[...] += jnp.dot(a_ref[...].astype(jnp.bfloat16), xk,
                            preferred_element_type=jnp.float32)

    @pl.when(k == pl.num_programs(1) - 1)
    def _():
        agg = (acc_ref[...] * inv_deg_ref[...]).astype(jnp.bfloat16)  # mean
        out = root_ref[...] + jnp.dot(agg, wl_ref[...],
                                      preferred_element_type=jnp.float32)
        if apply_relu:
            out = jnp.maximum(out, 0.0)
        o_ref[...] = out.astype(o_ref.dtype)


def sage_conv(a, inv_deg, x, w_l, w_r, b, *, apply_relu, tile, out_dtype):
    """One SAGEConv layer:  out = ((A @ x) * inv_deg) @ W_l + x @ W_r + b."""
    n_pad = a.shape[0]
    f_in = x.shape[1]
    f_out = w_l.shape[1]
    assert x.shape[0] == n_pad and w_r.shape == w_l.shape
    assert n_pad % tile == 0 and f_in % LANE == 0 and f_out % LANE == 0
    grid = (n_pad // tile, n_pad // tile)

    resident_x = n_pad * f_in * x.dtype.itemsize <= RESIDENT_X_BYTES
    if resident_x:
        # Whole X resident in VMEM (index map constant in i and k): one HBM
        # stream of X per layer instead of one per row tile.
        x_specs = [pl.BlockSpec((n_pad, f_in), lambda i, k: (0, 0))]
        x_args = (x,)
        x_stream_bytes = x.size * x.dtype.itemsize
    else:
        x_specs = [pl.BlockSpec((tile, f_in), lambda i, k: (k, 0)),   # neighbor rows
                   pl.BlockSpec((tile, f_in), lambda i, k: (i, 0))]   # root rows
        x_args = (x, x)
        x_stream_bytes = (grid[0] + 1) * x.size * x.dtype.itemsize

    flops = 2 * n_pad * n_pad * f_in + 4 * n_pad * f_in * f_out
    bytes_accessed = (
        a.size * a.dtype.itemsize                       # int8 adjacency (dominant)
        + x_stream_bytes
        + n_pad * f_out * jnp.dtype(out_dtype).itemsize
        + (w_l.size + w_r.size) * 2 + b.size * 4 + inv_deg.size * 4)

    kernel = functools.partial(_sage_layer_kernel, apply_relu, resident_x, tile)
    return pl.pallas_call(
        kernel,
        out_shape=jax.ShapeDtypeStruct((n_pad, f_out), out_dtype),
        grid_spec=pltpu.PrefetchScalarGridSpec(
            num_scalar_prefetch=0,
            grid=grid,
            in_specs=(
                [pl.BlockSpec((tile, tile), lambda i, k: (i, k))]      # A (int8)
                + x_specs
                + [pl.BlockSpec((tile, 1), lambda i, k: (i, 0)),       # 1/deg
                   pl.BlockSpec((f_in, f_out), lambda i, k: (0, 0)),   # W_l (resident)
                   pl.BlockSpec((f_in, f_out), lambda i, k: (0, 0)),   # W_r (resident)
                   pl.BlockSpec((1, f_out), lambda i, k: (0, 0))]      # bias (resident)
            ),
            out_specs=pl.BlockSpec((tile, f_out), lambda i, k: (i, 0)),
            scratch_shapes=[pltpu.VMEM((tile, f_in), jnp.float32),     # neighbor sum
                            pltpu.VMEM((tile, f_out), jnp.float32)],   # root term
        ),
        compiler_params=pltpu.CompilerParams(
            dimension_semantics=("parallel", "arbitrary"),
            vmem_limit_bytes=48 << 20,
        ),
        cost_estimate=pl.CostEstimate(
            flops=flops, transcendentals=0, bytes_accessed=int(bytes_accessed)),
    )(a, *x_args, inv_deg, w_l, w_r, b)


def build_adjacency(edge_index, num_nodes, n_pad):
    """int8 edge-count adjacency + f32 per-row 1/deg (host-side glue)."""
    src, dst = edge_index[0], edge_index[1]
    counts = jnp.zeros((n_pad, n_pad), jnp.float32).at[dst, src].add(1.0)
    deg = counts.sum(axis=1, keepdims=True)
    inv_deg = 1.0 / jnp.maximum(deg, 1.0)   # isolated nodes aggregate to 0 (PyG)
    # int8 HBM storage: exact for multi-edge multiplicities up to 127.
    assert float(jnp.max(counts)) <= 127.0, "edge multiplicity exceeds int8 range"
    return counts.astype(jnp.int8), inv_deg


def init_sage_params(key, dims):
    """dims = [input_dim, hidden_dim, hidden_dim, output_dim]."""
    params = []
    for d_in, d_out in zip(dims[:-1], dims[1:]):
        key, k1, k2, k3 = jax.random.split(key, 4)
        scale = 1.0 / jnp.sqrt(jnp.float32(d_in))
        w_l = jax.random.uniform(k1, (d_in, d_out), jnp.float32, -scale, scale)
        w_r = jax.random.uniform(k2, (d_in, d_out), jnp.float32, -scale, scale)
        b = jax.random.uniform(k3, (d_out,), jnp.float32, -scale, scale)
        params.append((w_l, w_r, b))
    return params


def graphsage_forward(x, edge_index, params, *, tile=256):
    n, f_in = x.shape
    n_pad = _round_up(n, tile)
    a, inv_deg = build_adjacency(edge_index, n, n_pad)

    f_out_final = params[-1][0].shape[1]
    # Features carried in bf16 between layers (bf16 MXU path).
    h = _pad2d(x, n_pad, _round_up(f_in, LANE)).astype(jnp.bfloat16)
    n_layers = len(params)
    for li, (w_l, w_r, b) in enumerate(params):
        d_in, d_out = w_l.shape
        d_in_pad = _round_up(d_in, LANE)
        d_out_pad = _round_up(d_out, LANE)
        wl_p = _pad2d(w_l, d_in_pad, d_out_pad).astype(jnp.bfloat16)
        wr_p = _pad2d(w_r, d_in_pad, d_out_pad).astype(jnp.bfloat16)
        b_p = _pad2d(b.reshape(1, -1), 1, d_out_pad)            # bias stays f32
        last = (li == n_layers - 1)
        h = sage_conv(a, inv_deg, h, wl_p, wr_p, b_p,
                      apply_relu=not last, tile=tile,
                      out_dtype=jnp.float32 if last else jnp.bfloat16)
    return h[:n, :f_out_final]


def graphsage_reference(x, edge_index, params):
    """Pure-JAX f32 reference for correctness checking."""
    n = x.shape[0]
    src, dst = edge_index[0], edge_index[1]
    a = jnp.zeros((n, n), jnp.float32).at[dst, src].add(1.0)
    deg = a.sum(axis=1, keepdims=True)
    a = a / jnp.maximum(deg, 1.0)

    def layer(h, p, relu):
        w_l, w_r, b = p
        out = (a @ h) @ w_l + h @ w_r + b[None, :]
        return jnp.maximum(out, 0.0) if relu else out

    h = layer(x, params[0], True)
    h = layer(h, params[1], True)
    h = layer(h, params[2], False)
    return h


if __name__ == "__main__":
    # Big enough that n_pad=768 with tile=256 gives a 3x3 grid per layer, so
    # the multi-k accumulation + init/finalize path is exercised.
    N, E = 600, 3000
    input_dim, hidden_dim, output_dim = 8, 32, 4

    key = jax.random.PRNGKey(0)
    kx, ksrc, kdst, kp = jax.random.split(key, 4)

    x = jax.random.normal(kx, (N, input_dim), jnp.float32)
    src = jax.random.randint(ksrc, (E,), 0, N)
    dst = jax.random.randint(kdst, (E,), 0, N)
    edge_index = jnp.stack([src, dst], axis=0)  # [2, E], row0=source, row1=target

    params = init_sage_params(kp, [input_dim, hidden_dim, hidden_dim, output_dim])

    out = graphsage_forward(x, edge_index, params, tile=256)
    out = jax.block_until_ready(out)

    ref = graphsage_reference(x, edge_index, params)
    assert out.shape == (N, output_dim)
    err = float(jnp.max(jnp.abs(out - ref)))
    scale = float(jnp.max(jnp.abs(ref)))
    # bf16 feature/weight path -> relaxed tolerance vs the pure-f32 reference.
    assert err <= 0.02 * scale + 0.05, (err, scale)

    print("KERNEL_OK")
</pallas_src>

<mosaic_0001>
module attributes {stable_mosaic.version = 11 : i64} {
  func.func @_sage_layer_kernel(%arg0: i32, %arg1: i32, %arg2: memref<256x256xi8, #tpu.memory_space<vmem>>, %arg3: memref<768x128xbf16, #tpu.memory_space<vmem>>, %arg4: memref<256x1xf32, #tpu.memory_space<vmem>>, %arg5: memref<128x128xbf16, #tpu.memory_space<vmem>>, %arg6: memref<128x128xbf16, #tpu.memory_space<vmem>>, %arg7: memref<1x128xf32, #tpu.memory_space<vmem>>, %arg8: memref<256x128xbf16, #tpu.memory_space<vmem>>, %arg9: memref<256x128xf32, #tpu.memory_space<vmem>>, %arg10: memref<256x128xf32, #tpu.memory_space<vmem>>) attributes {dimension_semantics = [#tpu.dimension_semantics<parallel>, #tpu.dimension_semantics<arbitrary>], iteration_bounds = array<i64: 3, 3>, scalar_prefetch = 0 : i64, scratch_operands = 2 : i64, tpu.core_type = #tpu.core_type<tc>, window_params = [{transform_indices = @transform_0, window_bounds = array<i64: 256, 256>}, {pipeline_mode = #tpu.pipeline_mode<synchronous>, transform_indices = @transform_1, window_bounds = array<i64: 768, 128>}, {transform_indices = @transform_2, window_bounds = array<i64: 256, 1>}, {pipeline_mode = #tpu.pipeline_mode<synchronous>, transform_indices = @transform_3, window_bounds = array<i64: 128, 128>}, {pipeline_mode = #tpu.pipeline_mode<synchronous>, transform_indices = @transform_4, window_bounds = array<i64: 128, 128>}, {pipeline_mode = #tpu.pipeline_mode<synchronous>, transform_indices = @transform_5, window_bounds = array<i64: 1, 128>}, {transform_indices = @transform_6, window_bounds = array<i64: 256, 128>}]} {
    %c0_i32 = arith.constant 0 : i32
    %0 = arith.cmpi eq, %arg1, %c0_i32 : i32
    %1 = arith.extui %0 : i1 to i32
    %c0_i32_0 = arith.constant 0 : i32
    %2 = arith.cmpi ne, %1, %c0_i32_0 : i32
    scf.if %2 {
      %cst_8 = arith.constant 0.000000e+00 : f32
      %16 = vector.broadcast %cst_8 : f32 to vector<256x128xf32>
      %c0_9 = arith.constant 0 : index
      %c0_10 = arith.constant 0 : index
      %17 = vector.load %arg9[%c0_9, %c0_10] : memref<256x128xf32, #tpu.memory_space<vmem>>, vector<256x128xf32>
      tpu.vector_store %arg9[%c0_9, %c0_10], %16 {strides = array<i32>} : memref<256x128xf32, #tpu.memory_space<vmem>>, vector<256x128xf32>,
      %c256_i32_11 = arith.constant 256 : i32
      %18 = arith.muli %arg0, %c256_i32_11 : i32
      %19 = tpu.assume_multiple %18, 256 : i32
      %20 = arith.index_cast %19 : i32 to index
      %c0_12 = arith.constant 0 : index
      %21 = vector.load %arg3[%20, %c0_12] : memref<768x128xbf16, #tpu.memory_space<vmem>>, vector<256x128xbf16>
      %c0_13 = arith.constant 0 : index
      %c0_14 = arith.constant 0 : index
      %22 = vector.load %arg6[%c0_13, %c0_14] : memref<128x128xbf16, #tpu.memory_space<vmem>>, vector<128x128xbf16>
      %cst_15 = arith.constant dense<0.000000e+00> : vector<256x128xf32>
      %23 = tpu.matmul %21, %22, %cst_15 {dimension_numbers = #tpu.dot_dimension_numbers<[1], [0], [0], [1], [0, 0, 1, 1], [], []>} : vector<256x128xbf16>, vector<128x128xbf16>, vector<256x128xf32> -> vector<256x128xf32>
      %c0_16 = arith.constant 0 : index
      %c0_17 = arith.constant 0 : index
      %24 = vector.load %arg7[%c0_16, %c0_17] : memref<1x128xf32, #tpu.memory_space<vmem>>, vector<1x128xf32>
      %25 = vector.broadcast %24 : vector<1x128xf32> to vector<256x128xf32>
      %26 = arith.addf %23, %25 : vector<256x128xf32>
      %c0_18 = arith.constant 0 : index
      %c0_19 = arith.constant 0 : index
      %27 = vector.load %arg10[%c0_18, %c0_19] : memref<256x128xf32, #tpu.memory_space<vmem>>, vector<256x128xf32>
      tpu.vector_store %arg10[%c0_18, %c0_19], %26 {strides = array<i32>} : memref<256x128xf32, #tpu.memory_space<vmem>>, vector<256x128xf32>,
    } else {
    }
    %c256_i32 = arith.constant 256 : i32
    %3 = arith.muli %arg1, %c256_i32 : i32
    %4 = tpu.assume_multiple %3, 256 : i32
    %5 = arith.index_cast %4 : i32 to index
    %c0 = arith.constant 0 : index
    %6 = vector.load %arg3[%5, %c0] : memref<768x128xbf16, #tpu.memory_space<vmem>>, vector<256x128xbf16>
    %c0_1 = arith.constant 0 : index
    %c0_2 = arith.constant 0 : index
    %7 = vector.load %arg9[%c0_1, %c0_2] : memref<256x128xf32, #tpu.memory_space<vmem>>, vector<256x128xf32>
    %c0_3 = arith.constant 0 : index
    %c0_4 = arith.constant 0 : index
    %8 = vector.load %arg2[%c0_3, %c0_4] : memref<256x256xi8, #tpu.memory_space<vmem>>, vector<256x256xi8>
    %9 = arith.sitofp %8 : vector<256x256xi8> to vector<256x256xbf16>
    %cst = arith.constant dense<0.000000e+00> : vector<256x128xf32>
    %10 = tpu.matmul %9, %6, %cst {dimension_numbers = #tpu.dot_dimension_numbers<[1], [0], [0], [1], [0, 0, 1, 1], [], []>} : vector<256x256xbf16>, vector<256x128xbf16>, vector<256x128xf32> -> vector<256x128xf32>
    %11 = arith.addf %7, %10 : vector<256x128xf32>
    %c0_5 = arith.constant 0 : index
    %c0_6 = arith.constant 0 : index
    %12 = vector.load %arg9[%c0_5, %c0_6] : memref<256x128xf32, #tpu.memory_space<vmem>>, vector<256x128xf32>
    tpu.vector_store %arg9[%c0_5, %c0_6], %11 {strides = array<i32>} : memref<256x128xf32, #tpu.memory_space<vmem>>, vector<256x128xf32>,
    %c2_i32 = arith.constant 2 : i32
    %13 = arith.cmpi eq, %arg1, %c2_i32 : i32
    %14 = arith.extui %13 : i1 to i32
    %c0_i32_7 = arith.constant 0 : i32
    %15 = arith.cmpi ne, %14, %c0_i32_7 : i32
    scf.if %15 {
      %c0_8 = arith.constant 0 : index
      %c0_9 = arith.constant 0 : index
      %16 = vector.load %arg9[%c0_8, %c0_9] : memref<256x128xf32, #tpu.memory_space<vmem>>, vector<256x128xf32>
      %c0_10 = arith.constant 0 : index
      %c0_11 = arith.constant 0 : index
      %17 = vector.load %arg4[%c0_10, %c0_11] : memref<256x1xf32, #tpu.memory_space<vmem>>, vector<256x1xf32>
      %18 = vector.broadcast %17 : vector<256x1xf32> to vector<256x128xf32>
      %19 = arith.mulf %16, %18 : vector<256x128xf32>
      %20 = arith.truncf %19 : vector<256x128xf32> to vector<256x128xbf16>
      %c0_12 = arith.constant 0 : index
      %c0_13 = arith.constant 0 : index
      %21 = vector.load %arg10[%c0_12, %c0_13] : memref<256x128xf32, #tpu.memory_space<vmem>>, vector<256x128xf32>
      %c0_14 = arith.constant 0 : index
      %c0_15 = arith.constant 0 : index
      %22 = vector.load %arg5[%c0_14, %c0_15] : memref<128x128xbf16, #tpu.memory_space<vmem>>, vector<128x128xbf16>
      %cst_16 = arith.constant dense<0.000000e+00> : vector<256x128xf32>
      %23 = tpu.matmul %20, %22, %cst_16 {dimension_numbers = #tpu.dot_dimension_numbers<[1], [0], [0], [1], [0, 0, 1, 1], [], []>} : vector<256x128xbf16>, vector<128x128xbf16>, vector<256x128xf32> -> vector<256x128xf32>
      %24 = arith.addf %21, %23 : vector<256x128xf32>
      %cst_17 = arith.constant 0.000000e+00 : f32
      %25 = vector.broadcast %cst_17 : f32 to vector<256x128xf32>
      %26 = arith.maximumf %24, %25 : vector<256x128xf32>
      %27 = arith.truncf %26 : vector<256x128xf32> to vector<256x128xbf16>
      %c0_18 = arith.constant 0 : index
      %c0_19 = arith.constant 0 : index
      %28 = vector.load %arg8[%c0_18, %c0_19] : memref<256x128xbf16, #tpu.memory_space<vmem>>, vector<256x128xbf16>
      tpu.vector_store %arg8[%c0_18, %c0_19], %27 {strides = array<i32>} : memref<256x128xbf16, #tpu.memory_space<vmem>>, vector<256x128xbf16>,
    } else {
    }
    return
  }
  func.func @transform_0(%arg0: i32, %arg1: i32) -> (i32, i32) {
    %c0_i32 = arith.constant 0 : i32
    return %arg0, %arg1 : i32, i32
  }
  func.func @transform_1(%arg0: i32, %arg1: i32) -> (i32, i32) {
    %c0_i32 = arith.constant 0 : i32
    %c0_i32_0 = arith.constant 0 : i32
    %c0_i32_1 = arith.constant 0 : i32
    return %c0_i32, %c0_i32_0 : i32, i32
  }
  func.func @transform_2(%arg0: i32, %arg1: i32) -> (i32, i32) {
    %c0_i32 = arith.constant 0 : i32
    %c0_i32_0 = arith.constant 0 : i32
    return %arg0, %c0_i32 : i32, i32
  }
  func.func @transform_3(%arg0: i32, %arg1: i32) -> (i32, i32) {
    %c0_i32 = arith.constant 0 : i32
    %c0_i32_0 = arith.constant 0 : i32
    %c0_i32_1 = arith.constant 0 : i32
    return %c0_i32, %c0_i32_0 : i32, i32
  }
  func.func @transform_4(%arg0: i32, %arg1: i32) -> (i32, i32) {
    %c0_i32 = arith.constant 0 : i32
    %c0_i32_0 = arith.constant 0 : i32
    %c0_i32_1 = arith.constant 0 : i32
    return %c0_i32, %c0_i32_0 : i32, i32
  }
  func.func @transform_5(%arg0: i32, %arg1: i32) -> (i32, i32) {
    %c0_i32 = arith.constant 0 : i32
    %c0_i32_0 = arith.constant 0 : i32
    %c0_i32_1 = arith.constant 0 : i32
    return %c0_i32, %c0_i32_0 : i32, i32
  }
  func.func @transform_6(%arg0: i32, %arg1: i32) -> (i32, i32) {
    %c0_i32 = arith.constant 0 : i32
    %c0_i32_0 = arith.constant 0 : i32
    return %arg0, %c0_i32 : i32, i32
  }
}

</mosaic_0001>

<llo_original>
// kernel: tpu_custom_call.1
$region0: #{tpu_custom_call.1}
  #allocation0 [shape = 'u32[]', space=smem, size = 0x4, offset = 0x4, fixed_abs, tag = 'smem constant byte address 0x4 - core index']
  #allocation1 [shape = 'u32[144,128]{1,0:T(1,128)}', space=vmem, size = 0x12000, scoped, tag = 'internal scratch']
  #allocation2 [shape = 'f32[256,128]{1,0:T(8,128)}', space=vmem, size = 0x20000, scoped, tag = 'scratch operand']
  #allocation3 [shape = 'f32[256,128]{1,0:T(8,128)}', space=vmem, size = 0x20000, scoped, tag = 'scratch operand']
  %s0 = inlined_call_operand.hbm [shape: s8[768,768], index: 0, kind: input, shape index: {}]
  %s1 = inlined_call_operand.vmem [shape: bf16[768,128], index: 1, kind: input, shape index: {}]
  %s2 = inlined_call_operand.vmem [shape: f32[768,1], index: 2, kind: input, shape index: {}]
  %s3 = inlined_call_operand.vmem [shape: bf16[128,128], index: 3, kind: input, shape index: {}]
  %s4 = inlined_call_operand.vmem [shape: bf16[128,128], index: 4, kind: input, shape index: {}]
  %s5 = inlined_call_operand.vmem [shape: f32[1,128], index: 5, kind: input, shape index: {}]
  %s6 = inlined_call_operand.hbm [shape: bf16[768,128], index: 6, kind: output, shape index: {}]
  %s7 = sld [smem:[#allocation0]]
  $region69: #{tpu_custom_call.1} parent=0
    _
  %s9 = ssub.s32 1, %s7
  %s10 = scalar_select 0, %s9, %s7
  $region1: #{tpu_custom_call.1} parent=0
    #allocation4 [shape = 'u8[131072]{0}', space=vmem, size = 0x20000, scoped, tag = 'input window, operand 0']
    #allocation5 [shape = 's32[2]{0}', space=sflag, size = 0x8, scoped, tag = 'scoped memory for tpu_custom_call.1']
    #allocation6 [shape = 's32[2]{0}', space=sflag, size = 0x8, scoped, tag = 'scoped memory for tpu_custom_call.1']
    #allocation7 [shape = 'u8[131072]{0}', space=vmem, size = 0x20000, scoped, tag = 'output window, operand 0']
    %11 = vsyncpa [#allocation5], 0
    %s12 = scalar_lea.sflag [#allocation5], 1
    %13 = vsyncpa %s12, 0
    %14 = vsyncpa [#allocation6], 0
    %s15 = scalar_lea.sflag [#allocation6], 1
    %16 = vsyncpa %s15, 0
    loop: start=0, step=1, limit=11
    $region2: #{tpu_custom_call.1} parent=1 // loop_pre_header
      _
    $region3: #{tpu_custom_call.1} parent=1 // loop_header
      %s18 = sphi 0, %s22
      %p19 = scmp.ge.s32.totalorder %s18, 11
      %s25 = sphi 0, %s37
      %s26 = sphi 0, %s33
      %s27 = sphi 0, %s25
      %s28 = sphi 0, %s26
      %s29 = sphi 0, %s27
      %s30 = sphi 0, %s28
      %s42 = sphi 0, %s44
      %s45 = sphi 0, %s42
      %s46 = sphi 0, %s45
      %s62 = sphi 0, %s46
      %s66 = sphi 0, %s66
      %s68 = sphi 0, %s66
      %s69 = sphi 0, %s68
      %s83 = sphi 0, %s69
      %s89 = sphi 0, %s91
      %s92 = sphi 0, %s89
      %s93 = sphi 0, %s92
      %s109 = sphi 0, %s93
      %s113 = sphi 0, %s113
      %s115 = sphi 0, %s113
      %s116 = sphi 0, %s115
      %s130 = sphi 0, %s116
      %s134 = sphi 0, %s134
      %s136 = sphi 0, %s134
      %s137 = sphi 0, %s136
      %s151 = sphi 0, %s137
      %s155 = sphi 0, %s155
      %s157 = sphi 0, %s155
      %s158 = sphi 0, %s157
      %s172 = sphi 0, %s158
      %s178 = sphi 0, %s180
      %s181 = sphi 0, %s178
      %s182 = sphi 0, %s181
      %s198 = sphi 0, %s182
    $region4: #{tpu_custom_call.1} parent=1 // loop_header_branch
      %21 = sbr.rel (%p19) target = $region8
    $region5: #{tpu_custom_call.1} parent=1 // loop_body
      %s23 = ssub.s32 %s18, 1
      %s24 = ssub.s32 %s18, 2
      %s31 = sadd.s32 1, %s26
      %p32 = scmp.ge.s32.totalorder %s31, 3
      %s33 = scalar_select %p32, 0, %s31
      %s34 = sadd.s32 1, %s25
      %s35 = scalar_select %p32, %s34, %s25
      %p36 = scmp.ge.s32.totalorder %s35, 3
      %s37 = scalar_select %p36, 0, %s35
      %s38 = ssub.s32 %s25, %s37
      %s39 = ssub.s32 %s26, %s33
      %s40 = sor.u32 %s38, %s39
      %p41 = scmp.eq.s32.totalorder %s40, 0
      %s43 = sadd.s32 %s42, 1
      %s44 = scalar_select %p41, %s42, %s43
      %p47 = pneg %p41
      %p48 = scmp.eq.s32.totalorder %s18, 8
      %p49 = por %p47, %p48
      %p50 = scmp.ne.s32.totalorder %s42, %s45
      %p51 = scmp.eq.s32.totalorder %s18, 0
      %p52 = por %p50, %p51
      %p53 = scmp.ne.s32.totalorder %s42, %s45
      %p54 = scmp.eq.s32.totalorder %s23, 8
      %p55 = por %p53, %p54
      %p56 = scmp.ne.s32.totalorder %s45, %s46
      %p57 = scmp.eq.s32.totalorder %s23, 0
      %p58 = por %p56, %p57
      %p59 = scmp.ne.s32.totalorder %s45, %s46
      %p60 = scmp.eq.s32.totalorder %s24, 8
      %p61 = por %p59, %p60
      %p63 = scmp.ne.s32.totalorder %s46, %s62
      %p64 = scmp.eq.s32.totalorder %s24, 0
      %p65 = por %p63, %p64
      %s67 = sadd.s32 %s66, 1
      %p70 = scmp.eq.s32.totalorder %s18, 8
      %p71 = scmp.ne.s32.totalorder %s66, %s68
      %p72 = scmp.eq.s32.totalorder %s18, 0
      %p73 = por %p71, %p72
      %p74 = scmp.ne.s32.totalorder %s66, %s68
      %p75 = scmp.eq.s32.totalorder %s23, 8
      %p76 = por %p74, %p75
      %p77 = scmp.ne.s32.totalorder %s68, %s69
      %p78 = scmp.eq.s32.totalorder %s23, 0
      %p79 = por %p77, %p78
      %p80 = scmp.ne.s32.totalorder %s68, %s69
      %p81 = scmp.eq.s32.totalorder %s24, 8
      %p82 = por %p80, %p81
      %p84 = scmp.ne.s32.totalorder %s69, %s83
      %p85 = scmp.eq.s32.totalorder %s24, 0
      %p86 = por %p84, %p85
      %s87 = ssub.s32 %s25, %s37
      %p88 = scmp.eq.s32.totalorder %s87, 0
      %s90 = sadd.s32 %s89, 1
      %s91 = scalar_select %p88, %s89, %s90
      %p94 = pneg %p88
      %p95 = scmp.eq.s32.totalorder %s18, 8
      %p96 = por %p94, %p95
      %p97 = scmp.ne.s32.totalorder %s89, %s92
      %p98 = scmp.eq.s32.totalorder %s18, 0
      %p99 = por %p97, %p98
      %p100 = scmp.ne.s32.totalorder %s89, %s92
      %p101 = scmp.eq.s32.totalorder %s23, 8
      %p102 = por %p100, %p101
      %p103 = scmp.ne.s32.totalorder %s92, %s93
      %p104 = scmp.eq.s32.totalorder %s23, 0
      %p105 = por %p103, %p104
      %p106 = scmp.ne.s32.totalorder %s92, %s93
      %p107 = scmp.eq.s32.totalorder %s24, 8
      %p108 = por %p106, %p107
      %p110 = scmp.ne.s32.totalorder %s93, %s109
      %p111 = scmp.eq.s32.totalorder %s24, 0
      %p112 = por %p110, %p111
      %s114 = sadd.s32 %s113, 1
      %p117 = scmp.eq.s32.totalorder %s18, 8
      %p118 = scmp.ne.s32.totalorder %s113, %s115
      %p119 = scmp.eq.s32.totalorder %s18, 0
      %p120 = por %p118, %p119
      %p121 = scmp.ne.s32.totalorder %s113, %s115
      %p122 = scmp.eq.s32.totalorder %s23, 8
      %p123 = por %p121, %p122
      %p124 = scmp.ne.s32.totalorder %s115, %s116
      %p125 = scmp.eq.s32.totalorder %s23, 0
      %p126 = por %p124, %p125
      %p127 = scmp.ne.s32.totalorder %s115, %s116
      %p128 = scmp.eq.s32.totalorder %s24, 8
      %p129 = por %p127, %p128
      %p131 = scmp.ne.s32.totalorder %s116, %s130
      %p132 = scmp.eq.s32.totalorder %s24, 0
      %p133 = por %p131, %p132
      %s135 = sadd.s32 %s134, 1
      %p138 = scmp.eq.s32.totalorder %s18, 8
      %p139 = scmp.ne.s32.totalorder %s134, %s136
      %p140 = scmp.eq.s32.totalorder %s18, 0
      %p141 = por %p139, %p140
      %p142 = scmp.ne.s32.totalorder %s134, %s136
      %p143 = scmp.eq.s32.totalorder %s23, 8
      %p144 = por %p142, %p143
      %p145 = scmp.ne.s32.totalorder %s136, %s137
      %p146 = scmp.eq.s32.totalorder %s23, 0
      %p147 = por %p145, %p146
      %p148 = scmp.ne.s32.totalorder %s136, %s137
      %p149 = scmp.eq.s32.totalorder %s24, 8
      %p150 = por %p148, %p149
      %p152 = scmp.ne.s32.totalorder %s137, %s151
      %p153 = scmp.eq.s32.totalorder %s24, 0
      %p154 = por %p152, %p153
      %s156 = sadd.s32 %s155, 1
      %p159 = scmp.eq.s32.totalorder %s18, 8
      %p160 = scmp.ne.s32.totalorder %s155, %s157
      %p161 = scmp.eq.s32.totalorder %s18, 0
      %p162 = por %p160, %p161
      %p163 = scmp.ne.s32.totalorder %s155, %s157
      %p164 = scmp.eq.s32.totalorder %s23, 8
      %p165 = por %p163, %p164
      %p166 = scmp.ne.s32.totalorder %s157, %s158
      %p167 = scmp.eq.s32.totalorder %s23, 0
      %p168 = por %p166, %p167
      %p169 = scmp.ne.s32.totalorder %s157, %s158
      %p170 = scmp.eq.s32.totalorder %s24, 8
      %p171 = por %p169, %p170
      %p173 = scmp.ne.s32.totalorder %s158, %s172
      %p174 = scmp.eq.s32.totalorder %s24, 0
      %p175 = por %p173, %p174
      %s176 = ssub.s32 %s25, %s37
      %p177 = scmp.eq.s32.totalorder %s176, 0
      %s179 = sadd.s32 %s178, 1
      %s180 = scalar_select %p177, %s178, %s179
      %p183 = pneg %p177
      %p184 = scmp.eq.s32.totalorder %s18, 8
      %p185 = por %p183, %p184
      %p186 = scmp.ne.s32.totalorder %s178, %s181
      %p187 = scmp.eq.s32.totalorder %s18, 0
      %p188 = por %p186, %p187
      %p189 = scmp.ne.s32.totalorder %s178, %s181
      %p190 = scmp.eq.s32.totalorder %s23, 8
      %p191 = por %p189, %p190
      %p192 = scmp.ne.s32.totalorder %s181, %s182
      %p193 = scmp.eq.s32.totalorder %s23, 0
      %p194 = por %p192, %p193
      %p195 = scmp.ne.s32.totalorder %s181, %s182
      %p196 = scmp.eq.s32.totalorder %s24, 8
      %p197 = por %p195, %p196
      %p199 = scmp.ne.s32.totalorder %s182, %s198
      %p200 = scmp.eq.s32.totalorder %s24, 0
      %p201 = por %p199, %p200
      %p202 = scmp.le.s32.totalorder 1, %s18
      %p203 = scmp.lt.s32.totalorder %s18, 10
      %p204 = pnand %p202, %p203
      %p205 = pneg %p204
      // Predicated region
      $region9: #{tpu_custom_call.1} parent=5 // pred_check
        _
      $region10: #{tpu_custom_call.1} parent=5 // pred_check_branch
        %207 = sbr.rel (%p204) target = $region12
      $region11: #{tpu_custom_call.1} parent=5 // pred_region
        %s208 = ssub.s32 %s18, 1
        // Predicated region
        $region13: #{tpu_custom_call.1} parent=11 // pred_check
          %p209 = pneg %p79
        $region14: #{tpu_custom_call.1} parent=11 // pred_check_branch
          %211 = sbr.rel (%p209) target = $region16
        $region15: #{tpu_custom_call.1} parent=11 // pred_region
          _
        $region16: #{tpu_custom_call.1} parent=11 // pred_fallthru
          _
        // Predicated region
        $region17: #{tpu_custom_call.1} parent=11 // pred_check
          %p212 = pneg %p126
        $region18: #{tpu_custom_call.1} parent=11 // pred_check_branch
          %214 = sbr.rel (%p212) target = $region20
        $region19: #{tpu_custom_call.1} parent=11 // pred_region
          _
        $region20: #{tpu_custom_call.1} parent=11 // pred_fallthru
          _
        // Predicated region
        $region21: #{tpu_custom_call.1} parent=11 // pred_check
          %p215 = pneg %p147
        $region22: #{tpu_custom_call.1} parent=11 // pred_check_branch
          %217 = sbr.rel (%p215) target = $region24
        $region23: #{tpu_custom_call.1} parent=11 // pred_region
          _
        $region24: #{tpu_custom_call.1} parent=11 // pred_fallthru
          _
        // Predicated region
        $region25: #{tpu_custom_call.1} parent=11 // pred_check
          %p218 = pneg %p168
        $region26: #{tpu_custom_call.1} parent=11 // pred_check_branch
          %220 = sbr.rel (%p218) target = $region28
        $region27: #{tpu_custom_call.1} parent=11 // pred_region
          _
        $region28: #{tpu_custom_call.1} parent=11 // pred_fallthru
          _
      $region12: #{tpu_custom_call.1} parent=5 // pred_fallthru
        _
      %p221 = scmp.lt.s32.totalorder %s18, 9
      // Predicated region
      $region29: #{tpu_custom_call.1} parent=5 // pred_check
        %p222 = pneg %p221
      $region30: #{tpu_custom_call.1} parent=5 // pred_check_branch
        %224 = sbr.rel (%p222) target = $region32
      $region31: #{tpu_custom_call.1} parent=5 // pred_region
        // Predicated region
        $region33: #{tpu_custom_call.1} parent=31 // pred_check
          %p225 = pneg %p52
        $region34: #{tpu_custom_call.1} parent=31 // pred_check_branch
          %227 = sbr.rel (%p225) target = $region36
        $region35: #{tpu_custom_call.1} parent=31 // pred_region
          %s228 = sand.u32 %s42, 1
          %s229 = scalar_lea.sflag [#allocation5], %s228
          %s230 = sand.u32 %s42, 1
          %s231 = smul.addr %s230, 128
          %s232 = scalar_lea.vmem [#allocation4], %s231
          %s233 = smul.u32 8, %s25
          %s234 = smul.u32 2, %s26
          %s236 = ssub.s32 2048, 2048
          %237 = vsyncadd %s229, %s236
          %s238 = smul.addr %s233, 6
          %s239 = sadd.s32 %s234, %s238
          %s240 = smul.addr %s239, 128
          %s241 = scalar_lea.hbm %s0, %s240
          %s242 = sshll.u32 %s232, 4
          %s243 = int_to_ptr.vmem [resolvable:$true] %s242
          %248 = dma.hbm_to_vmem [thread:$0]  %s241, 2048, %s243, %s229, 768, 256, 16
        $region36: #{tpu_custom_call.1} parent=31 // pred_fallthru
          _
        // Predicated region
        $region37: #{tpu_custom_call.1} parent=31 // pred_check
          %p249 = pneg %p99
        $region38: #{tpu_custom_call.1} parent=31 // pred_check_branch
          %251 = sbr.rel (%p249) target = $region40
        $region39: #{tpu_custom_call.1} parent=31 // pred_region
          %s252 = smul.u32 32, %s25
          %p253 = scmp.lt.s32.totalorder %s252, 95
          %s254 = scalar_select %p253, %s252, 95
          %s255 = smul.addr %s254, 8
          %s256 = scalar_lea.vmem %s2, %s255
          %s257 = smul.u32 32, %s25
        $region40: #{tpu_custom_call.1} parent=31 // pred_fallthru
          _
      $region32: #{tpu_custom_call.1} parent=5 // pred_fallthru
        _
      %p258 = scmp.le.s32.totalorder 1, %s18
      %p259 = scmp.lt.s32.totalorder %s18, 10
      %p260 = pnand %p258, %p259
      %p261 = pneg %p260
      // Predicated region
      $region41: #{tpu_custom_call.1} parent=5 // pred_check
        _
      $region42: #{tpu_custom_call.1} parent=5 // pred_check_branch
        %263 = sbr.rel (%p260) target = $region44
      $region43: #{tpu_custom_call.1} parent=5 // pred_region
        %s264 = ssub.s32 %s18, 1
        %s265 = sand.u32 %s45, 1
        %s266 = scalar_lea.sflag [#allocation5], %s265
        %s267 = sand.u32 %s45, 1
        %s268 = smul.addr %s267, 128
        %s269 = scalar_lea.vmem [#allocation4], %s268
        // Predicated region
        $region45: #{tpu_custom_call.1} parent=43 // pred_check
          %p270 = pneg %p58
        $region46: #{tpu_custom_call.1} parent=43 // pred_check_branch
          %272 = sbr.rel (%p270) target = $region48
        $region47: #{tpu_custom_call.1} parent=43 // pred_region
          %273 = dma.done %s266, 2048
        $region48: #{tpu_custom_call.1} parent=43 // pred_fallthru
          _
        %s274 = sand.u32 %s45, 1
        %s275 = scalar_lea.sflag [#allocation5], %s274
        %s276 = sand.u32 %s45, 1
        %s277 = smul.addr %s276, 128
        %s278 = scalar_lea.vmem [#allocation4], %s277
        %p279 = pneg %p58
        %p280 = pneg %p55
        %p281 = pneg %p79
        %p282 = pneg %p76
        %s283 = smul.u32 32, %s27
        %p284 = scmp.lt.s32.totalorder %s283, 95
        %s285 = scalar_select %p284, %s283, 95
        %s286 = smul.addr %s285, 8
        %s287 = scalar_lea.vmem %s2, %s286
        %p288 = pneg %p105
        %p289 = pneg %p102
        %p290 = pneg %p126
        %p291 = pneg %p123
        %p292 = pneg %p147
        %p293 = pneg %p144
        %p294 = pneg %p168
        %p295 = pneg %p165
        %p296 = pneg %p194
        %p297 = pneg %p191
        %s298 = sand.u32 %s181, 1
        %s299 = scalar_lea.sflag [#allocation6], %s298
        %s300 = sand.u32 %s181, 1
        %s301 = smul.addr %s300, 128
        %s302 = scalar_lea.vmem [#allocation7], %s301
        %s303 = smul.u32 8, %s27
        %s304 = smul.u32 2, %s28
        %s305 = smul.u32 32, %s27
        %p306 = scmp.lt.s32.totalorder %s305, 95
        %s307 = scalar_select %p306, %s305, 95
        %s308 = smul.addr %s307, 8
        %s309 = scalar_lea.vmem %s2, %s308
        %s310 = smul.u32 32, %s27
        %s311 = smul.u32 32, %s27
        %p313 = scmp.eq.s32.totalorder %s28, 0
        // Predicated region
        $region49: #{tpu_custom_call.1} parent=43 // pred_check
          %p314 = pneg %p313
        $region50: #{tpu_custom_call.1} parent=43 // pred_check_branch
          %316 = sbr.rel (%p314) target = $region52
        $region51: #{tpu_custom_call.1} parent=43 // pred_region
          %317 = vst [vmem:[#allocation2] sm:$0xff] 0.0
          %318 = vst [vmem:[#allocation2 + $0x8] sm:$0xff] 0.0
          %319 = vst [vmem:[#allocation2 + $0x10] sm:$0xff] 0.0
          %320 = vst [vmem:[#allocation2 + $0x18] sm:$0xff] 0.0
          %321 = vst [vmem:[#allocation2 + $0x20] sm:$0xff] 0.0
          %322 = vst [vmem:[#allocation2 + $0x28] sm:$0xff] 0.0
          %323 = vst [vmem:[#allocation2 + $0x30] sm:$0xff] 0.0
          %324 = vst [vmem:[#allocation2 + $0x38] sm:$0xff] 0.0
          %325 = vst [vmem:[#allocation2 + $0x40] sm:$0xff] 0.0
          %326 = vst [vmem:[#allocation2 + $0x48] sm:$0xff] 0.0
          %327 = vst [vmem:[#allocation2 + $0x50] sm:$0xff] 0.0
          %328 = vst [vmem:[#allocation2 + $0x58] sm:$0xff] 0.0
          %329 = vst [vmem:[#allocation2 + $0x60] sm:$0xff] 0.0
          %330 = vst [vmem:[#allocation2 + $0x68] sm:$0xff] 0.0
          %331 = vst [vmem:[#allocation2 + $0x70] sm:$0xff] 0.0
          %332 = vst [vmem:[#allocation2 + $0x78] sm:$0xff] 0.0
          %333 = vst [vmem:[#allocation2 + $0x80] sm:$0xff] 0.0
          %334 = vst [vmem:[#allocation2 + $0x88] sm:$0xff] 0.0
          %335 = vst [vmem:[#allocation2 + $0x90] sm:$0xff] 0.0
          %336 = vst [vmem:[#allocation2 + $0x98] sm:$0xff] 0.0
          %337 = vst [vmem:[#allocation2 + $0xa0] sm:$0xff] 0.0
          %338 = vst [vmem:[#allocation2 + $0xa8] sm:$0xff] 0.0
          %339 = vst [vmem:[#allocation2 + $0xb0] sm:$0xff] 0.0
          %340 = vst [vmem:[#allocation2 + $0xb8] sm:$0xff] 0.0
          %341 = vst [vmem:[#allocation2 + $0xc0] sm:$0xff] 0.0
          %342 = vst [vmem:[#allocation2 + $0xc8] sm:$0xff] 0.0
          %343 = vst [vmem:[#allocation2 + $0xd0] sm:$0xff] 0.0
          %344 = vst [vmem:[#allocation2 + $0xd8] sm:$0xff] 0.0
          %345 = vst [vmem:[#allocation2 + $0xe0] sm:$0xff] 0.0
          %346 = vst [vmem:[#allocation2 + $0xe8] sm:$0xff] 0.0
          %347 = vst [vmem:[#allocation2 + $0xf0] sm:$0xff] 0.0
          %348 = vst [vmem:[#allocation2 + $0xf8] sm:$0xff] 0.0
          %s349 = smul.u32 %s27, 256
          %s350 = sshra.s32 %s349, 3
          %s351 = sand.u32 %s349, 7
          %s352 = smul.addr %s350, 4
          %s353 = scalar_lea.vmem %s1, %s352
          %v354 = vld [vmem:[%s353] sm:$0xf]
          %v355 = vld [vmem:[%s353 + $0x4] sm:$0xf]
          %v356 = vld [vmem:[%s353 + $0x8] sm:$0xf]
          %v357 = vld [vmem:[%s353 + $0xc] sm:$0xf]
          %v358 = vld [vmem:[%s353 + $0x10] sm:$0xf]
          %v359 = vld [vmem:[%s353 + $0x14] sm:$0xf]
          %v360 = vld [vmem:[%s353 + $0x18] sm:$0xf]
          %v361 = vld [vmem:[%s353 + $0x1c] sm:$0xf]
          %v362 = vld [vmem:[%s353 + $0x20] sm:$0xf]
          %v363 = vld [vmem:[%s353 + $0x24] sm:$0xf]
          %v364 = vld [vmem:[%s353 + $0x28] sm:$0xf]
          %v365 = vld [vmem:[%s353 + $0x2c] sm:$0xf]
          %v366 = vld [vmem:[%s353 + $0x30] sm:$0xf]
          %v367 = vld [vmem:[%s353 + $0x34] sm:$0xf]
          %v368 = vld [vmem:[%s353 + $0x38] sm:$0xf]
          %v369 = vld [vmem:[%s353 + $0x3c] sm:$0xf]
          %v370 = vld [vmem:[%s353 + $0x40] sm:$0xf]
          %v371 = vld [vmem:[%s353 + $0x44] sm:$0xf]
          %v372 = vld [vmem:[%s353 + $0x48] sm:$0xf]
          %v373 = vld [vmem:[%s353 + $0x4c] sm:$0xf]
          %v374 = vld [vmem:[%s353 + $0x50] sm:$0xf]
          %v375 = vld [vmem:[%s353 + $0x54] sm:$0xf]
          %v376 = vld [vmem:[%s353 + $0x58] sm:$0xf]
          %v377 = vld [vmem:[%s353 + $0x5c] sm:$0xf]
          %v378 = vld [vmem:[%s353 + $0x60] sm:$0xf]
          %v379 = vld [vmem:[%s353 + $0x64] sm:$0xf]
          %v380 = vld [vmem:[%s353 + $0x68] sm:$0xf]
          %v381 = vld [vmem:[%s353 + $0x6c] sm:$0xf]
          %v382 = vld [vmem:[%s353 + $0x70] sm:$0xf]
          %v383 = vld [vmem:[%s353 + $0x74] sm:$0xf]
          %v384 = vld [vmem:[%s353 + $0x78] sm:$0xf]
          %v385 = vld [vmem:[%s353 + $0x7c] sm:$0xf]
          %v386 = vld [vmem:[%s4] sm:$0xf]
          %v387 = vld [vmem:[%s4 + $0x4] sm:$0xf]
          %v388 = vld [vmem:[%s4 + $0x8] sm:$0xf]
          %v389 = vld [vmem:[%s4 + $0xc] sm:$0xf]
          %v390 = vld [vmem:[%s4 + $0x10] sm:$0xf]
          %v391 = vld [vmem:[%s4 + $0x14] sm:$0xf]
          %v392 = vld [vmem:[%s4 + $0x18] sm:$0xf]
          %v393 = vld [vmem:[%s4 + $0x1c] sm:$0xf]
          %v394 = vld [vmem:[%s4 + $0x20] sm:$0xf]
          %v395 = vld [vmem:[%s4 + $0x24] sm:$0xf]
          %v396 = vld [vmem:[%s4 + $0x28] sm:$0xf]
          %v397 = vld [vmem:[%s4 + $0x2c] sm:$0xf]
          %v398 = vld [vmem:[%s4 + $0x30] sm:$0xf]
          %v399 = vld [vmem:[%s4 + $0x34] sm:$0xf]
          %v400 = vld [vmem:[%s4 + $0x38] sm:$0xf]
          %v401 = vld [vmem:[%s4 + $0x3c] sm:$0xf]
          %v402 = vld [vmem:[%s5] sm:$0x1]
          %v404 = vlaneseq
          %v405 = vshrl.u32 %v404, 7
          %v406 = vsub.s32 0, %v405
          %v407 = vrot.slane %v402, %v406
          %v441 = vunpack.c.l.b16 %v354
          %v442 = vunpack.c.l.b16 %v355
          %v443 = vunpack.c.l.b16 %v356
          %v444 = vunpack.c.l.b16 %v357
          %v445 = vunpack.c.l.b16 %v358
          %v446 = vunpack.c.l.b16 %v359
          %v447 = vunpack.c.l.b16 %v360
          %v448 = vunpack.c.l.b16 %v361
          %v449 = vunpack.c.l.b16 %v362
          %v450 = vunpack.c.l.b16 %v363
          %v451 = vunpack.c.l.b16 %v364
          %v452 = vunpack.c.l.b16 %v365
          %v453 = vunpack.c.l.b16 %v366
          %v454 = vunpack.c.l.b16 %v367
          %v455 = vunpack.c.l.b16 %v368
          %v456 = vunpack.c.l.b16 %v369
          %v457 = vunpack.c.l.b16 %v370
          %v458 = vunpack.c.l.b16 %v371
          %v459 = vunpack.c.l.b16 %v372
          %v460 = vunpack.c.l.b16 %v373
          %v461 = vunpack.c.l.b16 %v374
          %v462 = vunpack.c.l.b16 %v375
          %v463 = vunpack.c.l.b16 %v376
          %v464 = vunpack.c.l.b16 %v377
          %v465 = vunpack.c.l.b16 %v378
          %v466 = vunpack.c.l.b16 %v379
          %v467 = vunpack.c.l.b16 %v380
          %v468 = vunpack.c.l.b16 %v381
          %v469 = vunpack.c.l.b16 %v382
          %v470 = vunpack.c.l.b16 %v383
          %v471 = vunpack.c.l.b16 %v384
          %v472 = vunpack.c.l.b16 %v385
          %v473 = vpack.c.b16 %v442, %v441
          %v474 = vpack.c.b16 %v444, %v443
          %v475 = vpack.c.b16 %v446, %v445
          %v476 = vpack.c.b16 %v448, %v447
          %v477 = vpack.c.b16 %v450, %v449
          %v478 = vpack.c.b16 %v452, %v451
          %v479 = vpack.c.b16 %v454, %v453
          %v480 = vpack.c.b16 %v456, %v455
          %v481 = vpack.c.b16 %v458, %v457
          %v482 = vpack.c.b16 %v460, %v459
          %v483 = vpack.c.b16 %v462, %v461
          %v484 = vpack.c.b16 %v464, %v463
          %v485 = vpack.c.b16 %v466, %v465
          %v486 = vpack.c.b16 %v468, %v467
          %v487 = vpack.c.b16 %v470, %v469
          %v488 = vpack.c.b16 %v472, %v471
          %v521 = vunpack.c.l.b16 %v386
          %v522 = vunpack.c.l.b16 %v387
          %v523 = vunpack.c.l.b16 %v388
          %v524 = vunpack.c.l.b16 %v389
          %v525 = vunpack.c.l.b16 %v390
          %v526 = vunpack.c.l.b16 %v391
          %v527 = vunpack.c.l.b16 %v392
          %v528 = vunpack.c.l.b16 %v393
          %v529 = vunpack.c.l.b16 %v394
          %v530 = vunpack.c.l.b16 %v395
          %v531 = vunpack.c.l.b16 %v396
          %v532 = vunpack.c.l.b16 %v397
          %v533 = vunpack.c.l.b16 %v398
          %v534 = vunpack.c.l.b16 %v399
          %v535 = vunpack.c.l.b16 %v400
          %v536 = vunpack.c.l.b16 %v401
          %v537 = vpack.c.b16 %v522, %v521
          %v538 = vpack.c.b16 %v524, %v523
          %v539 = vpack.c.b16 %v526, %v525
          %v540 = vpack.c.b16 %v528, %v527
          %v541 = vpack.c.b16 %v530, %v529
          %v542 = vpack.c.b16 %v532, %v531
          %v543 = vpack.c.b16 %v534, %v533
          %v544 = vpack.c.b16 %v536, %v535
          %553 = vmatprep.subr.bf16.mxu0 0
          %554 = vmatpush1.bf16.msra.mxu0 %v544
          %555 = vmatprep.subr.bf16.mxu0 0
          %556 = vmatpush1.bf16.msra.mxu0 %v543
          %557 = vmatprep.subr.bf16.mxu0 0
          %558 = vmatpush1.bf16.msra.mxu0 %v542
          %559 = vmatprep.subr.bf16.mxu0 0
          %560 = vmatpush1.bf16.msra.mxu0 %v541
          %561 = vmatprep.subr.bf16.mxu0 0
          %562 = vmatpush1.bf16.msra.mxu0 %v540
          %563 = vmatprep.subr.bf16.mxu0 0
          %564 = vmatpush1.bf16.msra.mxu0 %v539
          %565 = vmatprep.subr.bf16.mxu0 0
          %566 = vmatpush1.bf16.msra.mxu0 %v538
          %567 = vmatprep.subr.bf16.mxu0 0
          %568 = vmatpush1.bf16.msra.mxu0 %v537
          %569 = vmatprep.subr.bf16.mxu0 0
          %570 = vmatpush2.bf16.msra.mxu0 0
          %571 = vmatprep.subr.bf16.mxu0 0
          %572 = vmatpush2.bf16.msra.mxu0 0
          %573 = vmatprep.subr.bf16.mxu0 0
          %574 = vmatpush2.bf16.msra.mxu0 0
          %575 = vmatprep.subr.bf16.mxu0 0
          %576 = vmatpush2.bf16.msra.mxu0 0
          %577 = vmatprep.subr.bf16.mxu0 0
          %578 = vmatpush2.bf16.msra.mxu0 0
          %579 = vmatprep.subr.bf16.mxu0 0
          %580 = vmatpush2.bf16.msra.mxu0 0
          %581 = vmatprep.subr.bf16.mxu0 0
          %582 = vmatpush2.bf16.msra.mxu0 0
          %583 = vmatprep.subr.bf16.mxu0 0
          %584 = vmatpush2.bf16.msra.mxu0 0
          %585 = vmatprep.mubr.bf16.mxu0 0
          %586 = vmatmul.mubr.bf16.gmra.mxu0 %v473
          %v587 = vpop.f32.mrf.mxu0
          %v588 = vadd.f32 %v407, %v587
          %v589 = vpop.f32.mrf.mxu0
          %v590 = vpop.f32.mrf.mxu0
          %v591 = vadd.f32 %v407, %v590
          %v592 = vpop.f32.mrf.mxu0
          %593 = vmatprep.mubr.bf16.mxu0 0
          %594 = vmatmul.mubr.bf16.gmra.mxu0 %v474
          %v595 = vpop.f32.mrf.mxu0
          %v596 = vadd.f32 %v407, %v595
          %v597 = vpop.f32.mrf.mxu0
          %v598 = vpop.f32.mrf.mxu0
          %v599 = vadd.f32 %v407, %v598
          %v600 = vpop.f32.mrf.mxu0
          %601 = vmatprep.mubr.bf16.mxu0 0
          %602 = vmatmul.mubr.bf16.gmra.mxu0 %v475
          %v603 = vpop.f32.mrf.mxu0
          %v604 = vadd.f32 %v407, %v603
          %v605 = vpop.f32.mrf.mxu0
          %v606 = vpop.f32.mrf.mxu0
          %v607 = vadd.f32 %v407, %v606
          %v608 = vpop.f32.mrf.mxu0
          %609 = vmatprep.mubr.bf16.mxu0 0
          %610 = vmatmul.mubr.bf16.gmra.mxu0 %v476
          %v611 = vpop.f32.mrf.mxu0
          %v612 = vadd.f32 %v407, %v611
          %v613 = vpop.f32.mrf.mxu0
          %v614 = vpop.f32.mrf.mxu0
          %v615 = vadd.f32 %v407, %v614
          %v616 = vpop.f32.mrf.mxu0
          %617 = vmatprep.mubr.bf16.mxu0 0
          %618 = vmatmul.mubr.bf16.gmra.mxu0 %v477
          %v619 = vpop.f32.mrf.mxu0
          %v620 = vadd.f32 %v407, %v619
          %v621 = vpop.f32.mrf.mxu0
          %v622 = vpop.f32.mrf.mxu0
          %v623 = vadd.f32 %v407, %v622
          %v624 = vpop.f32.mrf.mxu0
          %625 = vmatprep.mubr.bf16.mxu0 0
          %626 = vmatmul.mubr.bf16.gmra.mxu0 %v478
          %v627 = vpop.f32.mrf.mxu0
          %v628 = vadd.f32 %v407, %v627
          %v629 = vpop.f32.mrf.mxu0
          %v630 = vpop.f32.mrf.mxu0
          %v631 = vadd.f32 %v407, %v630
          %v632 = vpop.f32.mrf.mxu0
          %633 = vmatprep.mubr.bf16.mxu0 0
          %634 = vmatmul.mubr.bf16.gmra.mxu0 %v479
          %v635 = vpop.f32.mrf.mxu0
          %v636 = vadd.f32 %v407, %v635
          %v637 = vpop.f32.mrf.mxu0
          %v638 = vpop.f32.mrf.mxu0
          %v639 = vadd.f32 %v407, %v638
          %v640 = vpop.f32.mrf.mxu0
          %641 = vmatprep.mubr.bf16.mxu0 0
          %642 = vmatmul.mubr.bf16.gmra.mxu0 %v480
          %v643 = vpop.f32.mrf.mxu0
          %v644 = vadd.f32 %v407, %v643
          %v645 = vpop.f32.mrf.mxu0
          %v646 = vpop.f32.mrf.mxu0
          %v647 = vadd.f32 %v407, %v646
          %v648 = vpop.f32.mrf.mxu0
          %649 = vmatprep.mubr.bf16.mxu0 0
          %650 = vmatmul.mubr.bf16.gmra.mxu0 %v481
          %v651 = vpop.f32.mrf.mxu0
          %v652 = vadd.f32 %v407, %v651
          %v653 = vpop.f32.mrf.mxu0
          %v654 = vpop.f32.mrf.mxu0
          %v655 = vadd.f32 %v407, %v654
          %v656 = vpop.f32.mrf.mxu0
          %657 = vmatprep.mubr.bf16.mxu0 0
          %658 = vmatmul.mubr.bf16.gmra.mxu0 %v482
          %v659 = vpop.f32.mrf.mxu0
          %v660 = vadd.f32 %v407, %v659
          %v661 = vpop.f32.mrf.mxu0
          %v662 = vpop.f32.mrf.mxu0
          %v663 = vadd.f32 %v407, %v662
          %v664 = vpop.f32.mrf.mxu0
          %665 = vmatprep.mubr.bf16.mxu0 0
          %666 = vmatmul.mubr.bf16.gmra.mxu0 %v483
          %v667 = vpop.f32.mrf.mxu0
          %v668 = vadd.f32 %v407, %v667
          %v669 = vpop.f32.mrf.mxu0
          %v670 = vpop.f32.mrf.mxu0
          %v671 = vadd.f32 %v407, %v670
          %v672 = vpop.f32.mrf.mxu0
          %673 = vmatprep.mubr.bf16.mxu0 0
          %674 = vmatmul.mubr.bf16.gmra.mxu0 %v484
          %v675 = vpop.f32.mrf.mxu0
          %v676 = vadd.f32 %v407, %v675
          %v677 = vpop.f32.mrf.mxu0
          %v678 = vpop.f32.mrf.mxu0
          %v679 = vadd.f32 %v407, %v678
          %v680 = vpop.f32.mrf.mxu0
          %681 = vmatprep.mubr.bf16.mxu0 0
          %682 = vmatmul.mubr.bf16.gmra.mxu0 %v485
          %v683 = vpop.f32.mrf.mxu0
          %v684 = vadd.f32 %v407, %v683
          %v685 = vpop.f32.mrf.mxu0
          %v686 = vpop.f32.mrf.mxu0
          %v687 = vadd.f32 %v407, %v686
          %v688 = vpop.f32.mrf.mxu0
          %689 = vmatprep.mubr.bf16.mxu0 0
          %690 = vmatmul.mubr.bf16.gmra.mxu0 %v486
          %v691 = vpop.f32.mrf.mxu0
          %v692 = vadd.f32 %v407, %v691
          %v693 = vpop.f32.mrf.mxu0
          %v694 = vpop.f32.mrf.mxu0
          %v695 = vadd.f32 %v407, %v694
          %v696 = vpop.f32.mrf.mxu0
          %697 = vmatprep.mubr.bf16.mxu0 0
          %698 = vmatmul.mubr.bf16.gmra.mxu0 %v487
          %v699 = vpop.f32.mrf.mxu0
          %v700 = vadd.f32 %v407, %v699
          %v701 = vpop.f32.mrf.mxu0
          %v702 = vpop.f32.mrf.mxu0
          %v703 = vadd.f32 %v407, %v702
          %v704 = vpop.f32.mrf.mxu0
          %705 = vmatprep.mubr.bf16.mxu0 0
          %706 = vmatmul.mubr.bf16.gmra.mxu0 %v488
          %v707 = vpop.f32.mrf.mxu0
          %v708 = vadd.f32 %v407, %v707
          %v709 = vpop.f32.mrf.mxu0
          %v710 = vpop.f32.mrf.mxu0
          %v711 = vadd.f32 %v407, %v710
          %v712 = vpop.f32.mrf.mxu0
          %713 = vdwg.mxu0
          %714 = vst [vmem:[#allocation3] sm:$0xff] %v588
          %715 = vst [vmem:[#allocation3 + $0x8] sm:$0xff] %v591
          %716 = vst [vmem:[#allocation3 + $0x10] sm:$0xff] %v596
          %717 = vst [vmem:[#allocation3 + $0x18] sm:$0xff] %v599
          %718 = vst [vmem:[#allocation3 + $0x20] sm:$0xff] %v604
          %719 = vst [vmem:[#allocation3 + $0x28] sm:$0xff] %v607
          %720 = vst [vmem:[#allocation3 + $0x30] sm:$0xff] %v612
          %721 = vst [vmem:[#allocation3 + $0x38] sm:$0xff] %v615
          %722 = vst [vmem:[#allocation3 + $0x40] sm:$0xff] %v620
          %723 = vst [vmem:[#allocation3 + $0x48] sm:$0xff] %v623
          %724 = vst [vmem:[#allocation3 + $0x50] sm:$0xff] %v628
          %725 = vst [vmem:[#allocation3 + $0x58] sm:$0xff] %v631
          %726 = vst [vmem:[#allocation3 + $0x60] sm:$0xff] %v636
          %727 = vst [vmem:[#allocation3 + $0x68] sm:$0xff] %v639
          %728 = vst [vmem:[#allocation3 + $0x70] sm:$0xff] %v644
          %729 = vst [vmem:[#allocation3 + $0x78] sm:$0xff] %v647
          %730 = vst [vmem:[#allocation3 + $0x80] sm:$0xff] %v652
          %731 = vst [vmem:[#allocation3 + $0x88] sm:$0xff] %v655
          %732 = vst [vmem:[#allocation3 + $0x90] sm:$0xff] %v660
          %733 = vst [vmem:[#allocation3 + $0x98] sm:$0xff] %v663
          %734 = vst [vmem:[#allocation3 + $0xa0] sm:$0xff] %v668
          %735 = vst [vmem:[#allocation3 + $0xa8] sm:$0xff] %v671
          %736 = vst [vmem:[#allocation3 + $0xb0] sm:$0xff] %v676
          %737 = vst [vmem:[#allocation3 + $0xb8] sm:$0xff] %v679
          %738 = vst [vmem:[#allocation3 + $0xc0] sm:$0xff] %v684
          %739 = vst [vmem:[#allocation3 + $0xc8] sm:$0xff] %v687
          %740 = vst [vmem:[#allocation3 + $0xd0] sm:$0xff] %v692
          %741 = vst [vmem:[#allocation3 + $0xd8] sm:$0xff] %v695
          %742 = vst [vmem:[#allocation3 + $0xe0] sm:$0xff] %v700
          %743 = vst [vmem:[#allocation3 + $0xe8] sm:$0xff] %v703
          %744 = vst [vmem:[#allocation3 + $0xf0] sm:$0xff] %v708
          %745 = vst [vmem:[#allocation3 + $0xf8] sm:$0xff] %v711
        $region52: #{tpu_custom_call.1} parent=43 // pred_fallthru
          _
        %s746 = smul.u32 %s28, 256
        %s747 = sshra.s32 %s746, 3
        %s748 = sand.u32 %s746, 7
        %s749 = smul.addr %s747, 4
        %s750 = scalar_lea.vmem %s1, %s749
        %v751 = vld [vmem:[%s750] sm:$0xf]
        %v752 = vld [vmem:[%s750 + $0x4] sm:$0xf]
        %v753 = vld [vmem:[%s750 + $0x8] sm:$0xf]
        %v754 = vld [vmem:[%s750 + $0xc] sm:$0xf]
        %v755 = vld [vmem:[%s750 + $0x10] sm:$0xf]
        %v756 = vld [vmem:[%s750 + $0x14] sm:$0xf]
        %v757 = vld [vmem:[%s750 + $0x18] sm:$0xf]
        %v758 = vld [vmem:[%s750 + $0x1c] sm:$0xf]
        %v759 = vld [vmem:[%s750 + $0x20] sm:$0xf]
        %v760 = vld [vmem:[%s750 + $0x24] sm:$0xf]
        %v761 = vld [vmem:[%s750 + $0x28] sm:$0xf]
        %v762 = vld [vmem:[%s750 + $0x2c] sm:$0xf]
        %v763 = vld [vmem:[%s750 + $0x30] sm:$0xf]
        %v764 = vld [vmem:[%s750 + $0x34] sm:$0xf]
        %v765 = vld [vmem:[%s750 + $0x38] sm:$0xf]
        %v766 = vld [vmem:[%s750 + $0x3c] sm:$0xf]
        %v767 = vld [vmem:[%s750 + $0x40] sm:$0xf]
        %v768 = vld [vmem:[%s750 + $0x44] sm:$0xf]
        %v769 = vld [vmem:[%s750 + $0x48] sm:$0xf]
        %v770 = vld [vmem:[%s750 + $0x4c] sm:$0xf]
        %v771 = vld [vmem:[%s750 + $0x50] sm:$0xf]
        %v772 = vld [vmem:[%s750 + $0x54] sm:$0xf]
        %v773 = vld [vmem:[%s750 + $0x58] sm:$0xf]
        %v774 = vld [vmem:[%s750 + $0x5c] sm:$0xf]
        %v775 = vld [vmem:[%s750 + $0x60] sm:$0xf]
        %v776 = vld [vmem:[%s750 + $0x64] sm:$0xf]
        %v777 = vld [vmem:[%s750 + $0x68] sm:$0xf]
        %v778 = vld [vmem:[%s750 + $0x6c] sm:$0xf]
        %v779 = vld [vmem:[%s750 + $0x70] sm:$0xf]
        %v780 = vld [vmem:[%s750 + $0x74] sm:$0xf]
        %v781 = vld [vmem:[%s750 + $0x78] sm:$0xf]
        %v782 = vld [vmem:[%s750 + $0x7c] sm:$0xf]
        %v783 = vld [vmem:[#allocation2] sm:$0xff]
        %v784 = vld [vmem:[#allocation2 + $0x8] sm:$0xff]
        %v785 = vld [vmem:[#allocation2 + $0x10] sm:$0xff]
        %v786 = vld [vmem:[#allocation2 + $0x18] sm:$0xff]
        %v787 = vld [vmem:[#allocation2 + $0x20] sm:$0xff]
        %v788 = vld [vmem:[#allocation2 + $0x28] sm:$0xff]
        %v789 = vld [vmem:[#allocation2 + $0x30] sm:$0xff]
        %v790 = vld [vmem:[#allocation2 + $0x38] sm:$0xff]
        %v791 = vld [vmem:[#allocation2 + $0x40] sm:$0xff]
        %v792 = vld [vmem:[#allocation2 + $0x48] sm:$0xff]
        %v793 = vld [vmem:[#allocation2 + $0x50] sm:$0xff]
        %v794 = vld [vmem:[#allocation2 + $0x58] sm:$0xff]
        %v795 = vld [vmem:[#allocation2 + $0x60] sm:$0xff]
        %v796 = vld [vmem:[#allocation2 + $0x68] sm:$0xff]
        %v797 = vld [vmem:[#allocation2 + $0x70] sm:$0xff]
        %v798 = vld [vmem:[#allocation2 + $0x78] sm:$0xff]
        %v799 = vld [vmem:[#allocation2 + $0x80] sm:$0xff]
        %v800 = vld [vmem:[#allocation2 + $0x88] sm:$0xff]
        %v801 = vld [vmem:[#allocation2 + $0x90] sm:$0xff]
        %v802 = vld [vmem:[#allocation2 + $0x98] sm:$0xff]
        %v803 = vld [vmem:[#allocation2 + $0xa0] sm:$0xff]
        %v804 = vld [vmem:[#allocation2 + $0xa8] sm:$0xff]
        %v805 = vld [vmem:[#allocation2 + $0xb0] sm:$0xff]
        %v806 = vld [vmem:[#allocation2 + $0xb8] sm:$0xff]
        %v807 = vld [vmem:[#allocation2 + $0xc0] sm:$0xff]
        %v808 = vld [vmem:[#allocation2 + $0xc8] sm:$0xff]
        %v809 = vld [vmem:[#allocation2 + $0xd0] sm:$0xff]
        %v810 = vld [vmem:[#allocation2 + $0xd8] sm:$0xff]
        %v811 = vld [vmem:[#allocation2 + $0xe0] sm:$0xff]
        %v812 = vld [vmem:[#allocation2 + $0xe8] sm:$0xff]
        %v813 = vld [vmem:[#allocation2 + $0xf0] sm:$0xff]
        %v814 = vld [vmem:[#allocation2 + $0xf8] sm:$0xff]
        %v815 = vld [vmem:[%s269] sm:$0xff]
        %v816 = vld [vmem:[%s269 + $0x8] sm:$0xff]
        %v817 = vld [vmem:[%s269 + $0x10] sm:$0xff]
        %v818 = vld [vmem:[%s269 + $0x18] sm:$0xff]
        %v819 = vld [vmem:[%s269 + $0x20] sm:$0xff]
        %v820 = vld [vmem:[%s269 + $0x28] sm:$0xff]
        %v821 = vld [vmem:[%s269 + $0x30] sm:$0xff]
        %v822 = vld [vmem:[%s269 + $0x38] sm:$0xff]
        %v823 = vld [vmem:[%s269 + $0x40] sm:$0xff]
        %v824 = vld [vmem:[%s269 + $0x48] sm:$0xff]
        %v825 = vld [vmem:[%s269 + $0x50] sm:$0xff]
        %v826 = vld [vmem:[%s269 + $0x58] sm:$0xff]
        %v827 = vld [vmem:[%s269 + $0x60] sm:$0xff]
        %v828 = vld [vmem:[%s269 + $0x68] sm:$0xff]
        %v829 = vld [vmem:[%s269 + $0x70] sm:$0xff]
        %v830 = vld [vmem:[%s269 + $0x78] sm:$0xff]
        %v831 = vunpack.c.l.s8.bf16 %v815
        %v832 = vunpack.c.l.s8.bf16 %v816
        %v833 = vunpack.c.h.s8.bf16 %v815
        %v834 = vunpack.c.h.s8.bf16 %v816
        %v835 = vunpack.c.l.s8.bf16 %v817
        %v836 = vunpack.c.l.s8.bf16 %v818
        %v837 = vunpack.c.h.s8.bf16 %v817
        %v838 = vunpack.c.h.s8.bf16 %v818
        %v839 = vunpack.c.l.s8.bf16 %v819
        %v840 = vunpack.c.l.s8.bf16 %v820
        %v841 = vunpack.c.h.s8.bf16 %v819
        %v842 = vunpack.c.h.s8.bf16 %v820
        %v843 = vunpack.c.l.s8.bf16 %v821
        %v844 = vunpack.c.l.s8.bf16 %v822
        %v845 = vunpack.c.h.s8.bf16 %v821
        %v846 = vunpack.c.h.s8.bf16 %v822
        %v847 = vunpack.c.l.s8.bf16 %v823
        %v848 = vunpack.c.l.s8.bf16 %v824
        %v849 = vunpack.c.h.s8.bf16 %v823
        %v850 = vunpack.c.h.s8.bf16 %v824
        %v851 = vunpack.c.l.s8.bf16 %v825
        %v852 = vunpack.c.l.s8.bf16 %v826
        %v853 = vunpack.c.h.s8.bf16 %v825
        %v854 = vunpack.c.h.s8.bf16 %v826
        %v855 = vunpack.c.l.s8.bf16 %v827
        %v856 = vunpack.c.l.s8.bf16 %v828
        %v857 = vunpack.c.h.s8.bf16 %v827
        %v858 = vunpack.c.h.s8.bf16 %v828
        %v859 = vunpack.c.l.s8.bf16 %v829
        %v860 = vunpack.c.l.s8.bf16 %v830
        %v861 = vunpack.c.h.s8.bf16 %v829
        %v862 = vunpack.c.h.s8.bf16 %v830
        %v895 = vunpack.c.l.b16 %v751
        %v896 = vunpack.c.l.b16 %v752
        %v897 = vunpack.c.l.b16 %v753
        %v898 = vunpack.c.l.b16 %v754
        %v899 = vunpack.c.l.b16 %v755
        %v900 = vunpack.c.l.b16 %v756
        %v901 = vunpack.c.l.b16 %v757
        %v902 = vunpack.c.l.b16 %v758
        %v903 = vunpack.c.l.b16 %v759
        %v904 = vunpack.c.l.b16 %v760
        %v905 = vunpack.c.l.b16 %v761
        %v906 = vunpack.c.l.b16 %v762
        %v907 = vunpack.c.l.b16 %v763
        %v908 = vunpack.c.l.b16 %v764
        %v909 = vunpack.c.l.b16 %v765
        %v910 = vunpack.c.l.b16 %v766
        %v911 = vunpack.c.l.b16 %v767
        %v912 = vunpack.c.l.b16 %v768
        %v913 = vunpack.c.l.b16 %v769
        %v914 = vunpack.c.l.b16 %v770
        %v915 = vunpack.c.l.b16 %v771
        %v916 = vunpack.c.l.b16 %v772
        %v917 = vunpack.c.l.b16 %v773
        %v918 = vunpack.c.l.b16 %v774
        %v919 = vunpack.c.l.b16 %v775
        %v920 = vunpack.c.l.b16 %v776
        %v921 = vunpack.c.l.b16 %v777
        %v922 = vunpack.c.l.b16 %v778
        %v923 = vunpack.c.l.b16 %v779
        %v924 = vunpack.c.l.b16 %v780
        %v925 = vunpack.c.l.b16 %v781
        %v926 = vunpack.c.l.b16 %v782
        %v927 = vpack.c.b16 %v896, %v895
        %v928 = vpack.c.b16 %v898, %v897
        %v929 = vpack.c.b16 %v900, %v899
        %v930 = vpack.c.b16 %v902, %v901
        %v931 = vpack.c.b16 %v904, %v903
        %v932 = vpack.c.b16 %v906, %v905
        %v933 = vpack.c.b16 %v908, %v907
        %v934 = vpack.c.b16 %v910, %v909
        %v935 = vpack.c.b16 %v912, %v911
        %v936 = vpack.c.b16 %v914, %v913
        %v937 = vpack.c.b16 %v916, %v915
        %v938 = vpack.c.b16 %v918, %v917
        %v939 = vpack.c.b16 %v920, %v919
        %v940 = vpack.c.b16 %v922, %v921
        %v941 = vpack.c.b16 %v924, %v923
        %v942 = vpack.c.b16 %v926, %v925
        %959 = vmatprep.subr.bf16.mxu0 0
        %960 = vmatpush1.bf16.msra.mxu0 %v934
        %961 = vmatprep.subr.bf16.mxu0 0
        %962 = vmatpush1.bf16.msra.mxu0 %v933
        %963 = vmatprep.subr.bf16.mxu0 0
        %964 = vmatpush1.bf16.msra.mxu0 %v932
        %965 = vmatprep.subr.bf16.mxu0 0
        %966 = vmatpush1.bf16.msra.mxu0 %v931
        %967 = vmatprep.subr.bf16.mxu0 0
        %968 = vmatpush1.bf16.msra.mxu0 %v930
        %969 = vmatprep.subr.bf16.mxu0 0
        %970 = vmatpush1.bf16.msra.mxu0 %v929
        %971 = vmatprep.subr.bf16.mxu0 0
        %972 = vmatpush1.bf16.msra.mxu0 %v928
        %973 = vmatprep.subr.bf16.mxu0 0
        %974 = vmatpush1.bf16.msra.mxu0 %v927
        %975 = vmatprep.subr.bf16.mxu0 0
        %976 = vmatpush2.bf16.msra.mxu0 %v942
        %977 = vmatprep.subr.bf16.mxu0 0
        %978 = vmatpush2.bf16.msra.mxu0 %v941
        %979 = vmatprep.subr.bf16.mxu0 0
        %980 = vmatpush2.bf16.msra.mxu0 %v940
        %981 = vmatprep.subr.bf16.mxu0 0
        %982 = vmatpush2.bf16.msra.mxu0 %v939
        %983 = vmatprep.subr.bf16.mxu0 0
        %984 = vmatpush2.bf16.msra.mxu0 %v938
        %985 = vmatprep.subr.bf16.mxu0 0
        %986 = vmatpush2.bf16.msra.mxu0 %v937
        %987 = vmatprep.subr.bf16.mxu0 0
        %988 = vmatpush2.bf16.msra.mxu0 %v936
        %989 = vmatprep.subr.bf16.mxu0 0
        %990 = vmatpush2.bf16.msra.mxu0 %v935
        %991 = vmatprep.mubr.bf16.mxu0 %v832
        %992 = vmatmul.mubr.bf16.gmra.mxu0 %v831
        %v993 = vpop.f32.mrf.mxu0
        %v994 = vadd.f32 0.0, %v993
        %v995 = vpop.f32.mrf.mxu0
        %v996 = vpop.f32.mrf.mxu0
        %v997 = vadd.f32 0.0, %v996
        %v998 = vpop.f32.mrf.mxu0
        %999 = vmatprep.mubr.bf16.mxu0 %v834
        %1000 = vmatmul.mubr.bf16.gmra.mxu0 %v833
        %v1001 = vpop.f32.mrf.mxu0
        %v1002 = vadd.f32 0.0, %v1001
        %v1003 = vpop.f32.mrf.mxu0
        %v1004 = vpop.f32.mrf.mxu0
        %v1005 = vadd.f32 0.0, %v1004
        %v1006 = vpop.f32.mrf.mxu0
        %1007 = vmatprep.mubr.bf16.mxu0 %v836
        %1008 = vmatmul.mubr.bf16.gmra.mxu0 %v835
        %v1009 = vpop.f32.mrf.mxu0
        %v1010 = vadd.f32 0.0, %v1009
        %v1011 = vpop.f32.mrf.mxu0
        %v1012 = vpop.f32.mrf.mxu0
        %v1013 = vadd.f32 0.0, %v1012
        %v1014 = vpop.f32.mrf.mxu0
        %1015 = vmatprep.mubr.bf16.mxu0 %v838
        %1016 = vmatmul.mubr.bf16.gmra.mxu0 %v837
        %v1017 = vpop.f32.mrf.mxu0
        %v1018 = vadd.f32 0.0, %v1017
        %v1019 = vpop.f32.mrf.mxu0
        %v1020 = vpop.f32.mrf.mxu0
        %v1021 = vadd.f32 0.0, %v1020
        %v1022 = vpop.f32.mrf.mxu0
        %1023 = vmatprep.mubr.bf16.mxu0 %v840
        %1024 = vmatmul.mubr.bf16.gmra.mxu0 %v839
        %v1025 = vpop.f32.mrf.mxu0
        %v1026 = vadd.f32 0.0, %v1025
        %v1027 = vpop.f32.mrf.mxu0
        %v1028 = vpop.f32.mrf.mxu0
        %v1029 = vadd.f32 0.0, %v1028
        %v1030 = vpop.f32.mrf.mxu0
        %1031 = vmatprep.mubr.bf16.mxu0 %v842
        %1032 = vmatmul.mubr.bf16.gmra.mxu0 %v841
        %v1033 = vpop.f32.mrf.mxu0
        %v1034 = vadd.f32 0.0, %v1033
        %v1035 = vpop.f32.mrf.mxu0
        %v1036 = vpop.f32.mrf.mxu0
        %v1037 = vadd.f32 0.0, %v1036
        %v1038 = vpop.f32.mrf.mxu0
        %1039 = vmatprep.mubr.bf16.mxu0 %v844
        %1040 = vmatmul.mubr.bf16.gmra.mxu0 %v843
        %v1041 = vpop.f32.mrf.mxu0
        %v1042 = vadd.f32 0.0, %v1041
        %v1043 = vpop.f32.mrf.mxu0
        %v1044 = vpop.f32.mrf.mxu0
        %v1045 = vadd.f32 0.0, %v1044
        %v1046 = vpop.f32.mrf.mxu0
        %1047 = vmatprep.mubr.bf16.mxu0 %v846
        %1048 = vmatmul.mubr.bf16.gmra.mxu0 %v845
        %v1049 = vpop.f32.mrf.mxu0
        %v1050 = vadd.f32 0.0, %v1049
        %v1051 = vpop.f32.mrf.mxu0
        %v1052 = vpop.f32.mrf.mxu0
        %v1053 = vadd.f32 0.0, %v1052
        %v1054 = vpop.f32.mrf.mxu0
        %1055 = vmatprep.mubr.bf16.mxu0 %v848
        %1056 = vmatmul.mubr.bf16.gmra.mxu0 %v847
        %v1057 = vpop.f32.mrf.mxu0
        %v1058 = vadd.f32 0.0, %v1057
        %v1059 = vpop.f32.mrf.mxu0
        %v1060 = vpop.f32.mrf.mxu0
        %v1061 = vadd.f32 0.0, %v1060
        %v1062 = vpop.f32.mrf.mxu0
        %1063 = vmatprep.mubr.bf16.mxu0 %v850
        %1064 = vmatmul.mubr.bf16.gmra.mxu0 %v849
        %v1065 = vpop.f32.mrf.mxu0
        %v1066 = vadd.f32 0.0, %v1065
        %v1067 = vpop.f32.mrf.mxu0
        %v1068 = vpop.f32.mrf.mxu0
        %v1069 = vadd.f32 0.0, %v1068
        %v1070 = vpop.f32.mrf.mxu0
        %1071 = vmatprep.mubr.bf16.mxu0 %v852
        %1072 = vmatmul.mubr.bf16.gmra.mxu0 %v851
        %v1073 = vpop.f32.mrf.mxu0
        %v1074 = vadd.f32 0.0, %v1073
        %v1075 = vpop.f32.mrf.mxu0
        %v1076 = vpop.f32.mrf.mxu0
        %v1077 = vadd.f32 0.0, %v1076
        %v1078 = vpop.f32.mrf.mxu0
        %1079 = vmatprep.mubr.bf16.mxu0 %v854
        %1080 = vmatmul.mubr.bf16.gmra.mxu0 %v853
        %v1081 = vpop.f32.mrf.mxu0
        %v1082 = vadd.f32 0.0, %v1081
        %v1083 = vpop.f32.mrf.mxu0
        %v1084 = vpop.f32.mrf.mxu0
        %v1085 = vadd.f32 0.0, %v1084
        %v1086 = vpop.f32.mrf.mxu0
        %1087 = vmatprep.mubr.bf16.mxu0 %v856
        %1088 = vmatmul.mubr.bf16.gmra.mxu0 %v855
        %v1089 = vpop.f32.mrf.mxu0
        %v1090 = vadd.f32 0.0, %v1089
        %v1091 = vpop.f32.mrf.mxu0
        %v1092 = vpop.f32.mrf.mxu0
        %v1093 = vadd.f32 0.0, %v1092
        %v1094 = vpop.f32.mrf.mxu0
        %1095 = vmatprep.mubr.bf16.mxu0 %v858
        %1096 = vmatmul.mubr.bf16.gmra.mxu0 %v857
        %v1097 = vpop.f32.mrf.mxu0
        %v1098 = vadd.f32 0.0, %v1097
        %v1099 = vpop.f32.mrf.mxu0
        %v1100 = vpop.f32.mrf.mxu0
        %v1101 = vadd.f32 0.0, %v1100
        %v1102 = vpop.f32.mrf.mxu0
        %1103 = vmatprep.mubr.bf16.mxu0 %v860
        %1104 = vmatmul.mubr.bf16.gmra.mxu0 %v859
        %v1105 = vpop.f32.mrf.mxu0
        %v1106 = vadd.f32 0.0, %v1105
        %v1107 = vpop.f32.mrf.mxu0
        %v1108 = vpop.f32.mrf.mxu0
        %v1109 = vadd.f32 0.0, %v1108
        %v1110 = vpop.f32.mrf.mxu0
        %1111 = vmatprep.mubr.bf16.mxu0 %v862
        %1112 = vmatmul.mubr.bf16.gmra.mxu0 %v861
        %v1113 = vpop.f32.mrf.mxu0
        %v1114 = vadd.f32 0.0, %v1113
        %v1115 = vpop.f32.mrf.mxu0
        %v1116 = vpop.f32.mrf.mxu0
        %v1117 = vadd.f32 0.0, %v1116
        %v1118 = vpop.f32.mrf.mxu0
        %1119 = vdwg.mxu0
        %v1120 = vadd.f32 %v783, %v994
        %v1121 = vadd.f32 %v784, %v997
        %v1122 = vadd.f32 %v785, %v1002
        %v1123 = vadd.f32 %v786, %v1005
        %v1124 = vadd.f32 %v787, %v1010
        %v1125 = vadd.f32 %v788, %v1013
        %v1126 = vadd.f32 %v789, %v1018
        %v1127 = vadd.f32 %v790, %v1021
        %v1128 = vadd.f32 %v791, %v1026
        %v1129 = vadd.f32 %v792, %v1029
        %v1130 = vadd.f32 %v793, %v1034
        %v1131 = vadd.f32 %v794, %v1037
        %v1132 = vadd.f32 %v795, %v1042
        %v1133 = vadd.f32 %v796, %v1045
        %v1134 = vadd.f32 %v797, %v1050
        %v1135 = vadd.f32 %v798, %v1053
        %v1136 = vadd.f32 %v799, %v1058
        %v1137 = vadd.f32 %v800, %v1061
        %v1138 = vadd.f32 %v801, %v1066
        %v1139 = vadd.f32 %v802, %v1069
        %v1140 = vadd.f32 %v803, %v1074
        %v1141 = vadd.f32 %v804, %v1077
        %v1142 = vadd.f32 %v805, %v1082
        %v1143 = vadd.f32 %v806, %v1085
        %v1144 = vadd.f32 %v807, %v1090
        %v1145 = vadd.f32 %v808, %v1093
        %v1146 = vadd.f32 %v809, %v1098
        %v1147 = vadd.f32 %v810, %v1101
        %v1148 = vadd.f32 %v811, %v1106
        %v1149 = vadd.f32 %v812, %v1109
        %v1150 = vadd.f32 %v813, %v1114
        %v1151 = vadd.f32 %v814, %v1117
        %1152 = vst [vmem:[#allocation2] sm:$0xff] %v1120
        %1153 = vst [vmem:[#allocation2 + $0x8] sm:$0xff] %v1121
        %1154 = vst [vmem:[#allocation2 + $0x10] sm:$0xff] %v1122
        %1155 = vst [vmem:[#allocation2 + $0x18] sm:$0xff] %v1123
        %1156 = vst [vmem:[#allocation2 + $0x20] sm:$0xff] %v1124
        %1157 = vst [vmem:[#allocation2 + $0x28] sm:$0xff] %v1125
        %1158 = vst [vmem:[#allocation2 + $0x30] sm:$0xff] %v1126
        %1159 = vst [vmem:[#allocation2 + $0x38] sm:$0xff] %v1127
        %1160 = vst [vmem:[#allocation2 + $0x40] sm:$0xff] %v1128
        %1161 = vst [vmem:[#allocation2 + $0x48] sm:$0xff] %v1129
        %1162 = vst [vmem:[#allocation2 + $0x50] sm:$0xff] %v1130
        %1163 = vst [vmem:[#allocation2 + $0x58] sm:$0xff] %v1131
        %1164 = vst [vmem:[#allocation2 + $0x60] sm:$0xff] %v1132
        %1165 = vst [vmem:[#allocation2 + $0x68] sm:$0xff] %v1133
        %1166 = vst [vmem:[#allocation2 + $0x70] sm:$0xff] %v1134
        %1167 = vst [vmem:[#allocation2 + $0x78] sm:$0xff] %v1135
        %1168 = vst [vmem:[#allocation2 + $0x80] sm:$0xff] %v1136
        %1169 = vst [vmem:[#allocation2 + $0x88] sm:$0xff] %v1137
        %1170 = vst [vmem:[#allocation2 + $0x90] sm:$0xff] %v1138
        %1171 = vst [vmem:[#allocation2 + $0x98] sm:$0xff] %v1139
        %1172 = vst [vmem:[#allocation2 + $0xa0] sm:$0xff] %v1140
        %1173 = vst [vmem:[#allocation2 + $0xa8] sm:$0xff] %v1141
        %1174 = vst [vmem:[#allocation2 + $0xb0] sm:$0xff] %v1142
        %1175 = vst [vmem:[#allocation2 + $0xb8] sm:$0xff] %v1143
        %1176 = vst [vmem:[#allocation2 + $0xc0] sm:$0xff] %v1144
        %1177 = vst [vmem:[#allocation2 + $0xc8] sm:$0xff] %v1145
        %1178 = vst [vmem:[#allocation2 + $0xd0] sm:$0xff] %v1146
        %1179 = vst [vmem:[#allocation2 + $0xd8] sm:$0xff] %v1147
        %1180 = vst [vmem:[#allocation2 + $0xe0] sm:$0xff] %v1148
        %1181 = vst [vmem:[#allocation2 + $0xe8] sm:$0xff] %v1149
        %1182 = vst [vmem:[#allocation2 + $0xf0] sm:$0xff] %v1150
        %1183 = vst [vmem:[#allocation2 + $0xf8] sm:$0xff] %v1151
        %p1184 = scmp.eq.s32.totalorder %s28, 2
        // Predicated region
        $region53: #{tpu_custom_call.1} parent=43 // pred_check
          %p1185 = pneg %p1184
        $region54: #{tpu_custom_call.1} parent=43 // pred_check_branch
          %1187 = sbr.rel (%p1185) target = $region56
        $region55: #{tpu_custom_call.1} parent=43 // pred_region
          %v1188 = vld [vmem:[#allocation2] sm:$0xff]
          %v1189 = vld [vmem:[#allocation2 + $0x8] sm:$0xff]
          %v1190 = vld [vmem:[#allocation2 + $0x10] sm:$0xff]
          %v1191 = vld [vmem:[#allocation2 + $0x18] sm:$0xff]
          %v1192 = vld [vmem:[#allocation2 + $0x20] sm:$0xff]
          %v1193 = vld [vmem:[#allocation2 + $0x28] sm:$0xff]
          %v1194 = vld [vmem:[#allocation2 + $0x30] sm:$0xff]
          %v1195 = vld [vmem:[#allocation2 + $0x38] sm:$0xff]
          %v1196 = vld [vmem:[#allocation2 + $0x40] sm:$0xff]
          %v1197 = vld [vmem:[#allocation2 + $0x48] sm:$0xff]
          %v1198 = vld [vmem:[#allocation2 + $0x50] sm:$0xff]
          %v1199 = vld [vmem:[#allocation2 + $0x58] sm:$0xff]
          %v1200 = vld [vmem:[#allocation2 + $0x60] sm:$0xff]
          %v1201 = vld [vmem:[#allocation2 + $0x68] sm:$0xff]
          %v1202 = vld [vmem:[#allocation2 + $0x70] sm:$0xff]
          %v1203 = vld [vmem:[#allocation2 + $0x78] sm:$0xff]
          %v1204 = vld [vmem:[#allocation2 + $0x80] sm:$0xff]
          %v1205 = vld [vmem:[#allocation2 + $0x88] sm:$0xff]
          %v1206 = vld [vmem:[#allocation2 + $0x90] sm:$0xff]
          %v1207 = vld [vmem:[#allocation2 + $0x98] sm:$0xff]
          %v1208 = vld [vmem:[#allocation2 + $0xa0] sm:$0xff]
          %v1209 = vld [vmem:[#allocation2 + $0xa8] sm:$0xff]
          %v1210 = vld [vmem:[#allocation2 + $0xb0] sm:$0xff]
          %v1211 = vld [vmem:[#allocation2 + $0xb8] sm:$0xff]
          %v1212 = vld [vmem:[#allocation2 + $0xc0] sm:$0xff]
          %v1213 = vld [vmem:[#allocation2 + $0xc8] sm:$0xff]
          %v1214 = vld [vmem:[#allocation2 + $0xd0] sm:$0xff]
          %v1215 = vld [vmem:[#allocation2 + $0xd8] sm:$0xff]
          %v1216 = vld [vmem:[#allocation2 + $0xe0] sm:$0xff]
          %v1217 = vld [vmem:[#allocation2 + $0xe8] sm:$0xff]
          %v1218 = vld [vmem:[#allocation2 + $0xf0] sm:$0xff]
          %v1219 = vld [vmem:[#allocation2 + $0xf8] sm:$0xff]
          %v1220 = vld [vmem:[%s309] sm:$0xff]
          %v1221 = vld [vmem:[%s309 + $0x8] sm:$0xff]
          %v1222 = vld [vmem:[%s309 + $0x10] sm:$0xff]
          %v1223 = vld [vmem:[%s309 + $0x18] sm:$0xff]
          %v1224 = vld [vmem:[%s309 + $0x20] sm:$0xff]
          %v1225 = vld [vmem:[%s309 + $0x28] sm:$0xff]
          %v1226 = vld [vmem:[%s309 + $0x30] sm:$0xff]
          %v1227 = vld [vmem:[%s309 + $0x38] sm:$0xff]
          %v1228 = vld [vmem:[%s309 + $0x40] sm:$0xff]
          %v1229 = vld [vmem:[%s309 + $0x48] sm:$0xff]
          %v1230 = vld [vmem:[%s309 + $0x50] sm:$0xff]
          %v1231 = vld [vmem:[%s309 + $0x58] sm:$0xff]
          %v1232 = vld [vmem:[%s309 + $0x60] sm:$0xff]
          %v1233 = vld [vmem:[%s309 + $0x68] sm:$0xff]
          %v1234 = vld [vmem:[%s309 + $0x70] sm:$0xff]
          %v1235 = vld [vmem:[%s309 + $0x78] sm:$0xff]
          %v1236 = vld [vmem:[%s309 + $0x80] sm:$0xff]
          %v1237 = vld [vmem:[%s309 + $0x88] sm:$0xff]
          %v1238 = vld [vmem:[%s309 + $0x90] sm:$0xff]
          %v1239 = vld [vmem:[%s309 + $0x98] sm:$0xff]
          %v1240 = vld [vmem:[%s309 + $0xa0] sm:$0xff]
          %v1241 = vld [vmem:[%s309 + $0xa8] sm:$0xff]
          %v1242 = vld [vmem:[%s309 + $0xb0] sm:$0xff]
          %v1243 = vld [vmem:[%s309 + $0xb8] sm:$0xff]
          %v1244 = vld [vmem:[%s309 + $0xc0] sm:$0xff]
          %v1245 = vld [vmem:[%s309 + $0xc8] sm:$0xff]
          %v1246 = vld [vmem:[%s309 + $0xd0] sm:$0xff]
          %v1247 = vld [vmem:[%s309 + $0xd8] sm:$0xff]
          %v1248 = vld [vmem:[%s309 + $0xe0] sm:$0xff]
          %v1249 = vld [vmem:[%s309 + $0xe8] sm:$0xff]
          %v1250 = vld [vmem:[%s309 + $0xf0] sm:$0xff]
          %v1251 = vld [vmem:[%s309 + $0xf8] sm:$0xff]
          %1253 = vset.pattern.permute.xlu0 0
          %1254 = vperm.xlu0 %1253, %v1220
          %v1255 = vpop.permute.xlu0 %1254
          %1258 = vset.pattern.permute.xlu0 0
          %1259 = vperm.xlu0 %1258, %v1221
          %v1260 = vpop.permute.xlu0 %1259
          %1263 = vset.pattern.permute.xlu0 0
          %1264 = vperm.xlu0 %1263, %v1222
          %v1265 = vpop.permute.xlu0 %1264
          %1268 = vset.pattern.permute.xlu0 0
          %1269 = vperm.xlu0 %1268, %v1223
          %v1270 = vpop.permute.xlu0 %1269
          %1273 = vset.pattern.permute.xlu0 0
          %1274 = vperm.xlu0 %1273, %v1224
          %v1275 = vpop.permute.xlu0 %1274
          %1278 = vset.pattern.permute.xlu0 0
          %1279 = vperm.xlu0 %1278, %v1225
          %v1280 = vpop.permute.xlu0 %1279
          %1283 = vset.pattern.permute.xlu0 0
          %1284 = vperm.xlu0 %1283, %v1226
          %v1285 = vpop.permute.xlu0 %1284
          %1288 = vset.pattern.permute.xlu0 0
          %1289 = vperm.xlu0 %1288, %v1227
          %v1290 = vpop.permute.xlu0 %1289
          %1293 = vset.pattern.permute.xlu0 0
          %1294 = vperm.xlu0 %1293, %v1228
          %v1295 = vpop.permute.xlu0 %1294
          %1298 = vset.pattern.permute.xlu0 0
          %1299 = vperm.xlu0 %1298, %v1229
          %v1300 = vpop.permute.xlu0 %1299
          %1303 = vset.pattern.permute.xlu0 0
          %1304 = vperm.xlu0 %1303, %v1230
          %v1305 = vpop.permute.xlu0 %1304
          %1308 = vset.pattern.permute.xlu0 0
          %1309 = vperm.xlu0 %1308, %v1231
          %v1310 = vpop.permute.xlu0 %1309
          %1313 = vset.pattern.permute.xlu0 0
          %1314 = vperm.xlu0 %1313, %v1232
          %v1315 = vpop.permute.xlu0 %1314
          %1318 = vset.pattern.permute.xlu0 0
          %1319 = vperm.xlu0 %1318, %v1233
          %v1320 = vpop.permute.xlu0 %1319
          %1323 = vset.pattern.permute.xlu0 0
          %1324 = vperm.xlu0 %1323, %v1234
          %v1325 = vpop.permute.xlu0 %1324
          %1328 = vset.pattern.permute.xlu0 0
          %1329 = vperm.xlu0 %1328, %v1235
          %v1330 = vpop.permute.xlu0 %1329
          %1333 = vset.pattern.permute.xlu0 0
          %1334 = vperm.xlu0 %1333, %v1236
          %v1335 = vpop.permute.xlu0 %1334
          %1338 = vset.pattern.permute.xlu0 0
          %1339 = vperm.xlu0 %1338, %v1237
          %v1340 = vpop.permute.xlu0 %1339
          %1343 = vset.pattern.permute.xlu0 0
          %1344 = vperm.xlu0 %1343, %v1238
          %v1345 = vpop.permute.xlu0 %1344
          %1348 = vset.pattern.permute.xlu0 0
          %1349 = vperm.xlu0 %1348, %v1239
          %v1350 = vpop.permute.xlu0 %1349
          %1353 = vset.pattern.permute.xlu0 0
          %1354 = vperm.xlu0 %1353, %v1240
          %v1355 = vpop.permute.xlu0 %1354
          %1358 = vset.pattern.permute.xlu0 0
          %1359 = vperm.xlu0 %1358, %v1241
          %v1360 = vpop.permute.xlu0 %1359
          %1363 = vset.pattern.permute.xlu0 0
          %1364 = vperm.xlu0 %1363, %v1242
          %v1365 = vpop.permute.xlu0 %1364
          %1368 = vset.pattern.permute.xlu0 0
          %1369 = vperm.xlu0 %1368, %v1243
          %v1370 = vpop.permute.xlu0 %1369
          %1373 = vset.pattern.permute.xlu0 0
          %1374 = vperm.xlu0 %1373, %v1244
          %v1375 = vpop.permute.xlu0 %1374
          %1378 = vset.pattern.permute.xlu0 0
          %1379 = vperm.xlu0 %1378, %v1245
          %v1380 = vpop.permute.xlu0 %1379
          %1383 = vset.pattern.permute.xlu0 0
          %1384 = vperm.xlu0 %1383, %v1246
          %v1385 = vpop.permute.xlu0 %1384
          %1388 = vset.pattern.permute.xlu0 0
          %1389 = vperm.xlu0 %1388, %v1247
          %v1390 = vpop.permute.xlu0 %1389
          %1393 = vset.pattern.permute.xlu0 0
          %1394 = vperm.xlu0 %1393, %v1248
          %v1395 = vpop.permute.xlu0 %1394
          %1398 = vset.pattern.permute.xlu0 0
          %1399 = vperm.xlu0 %1398, %v1249
          %v1400 = vpop.permute.xlu0 %1399
          %1403 = vset.pattern.permute.xlu0 0
          %1404 = vperm.xlu0 %1403, %v1250
          %v1405 = vpop.permute.xlu0 %1404
          %1408 = vset.pattern.permute.xlu0 0
          %1409 = vperm.xlu0 %1408, %v1251
          %v1410 = vpop.permute.xlu0 %1409
          %v1412 = vmul.f32 %v1188, %v1255
          %v1413 = vmul.f32 %v1189, %v1260
          %v1414 = vmul.f32 %v1190, %v1265
          %v1415 = vmul.f32 %v1191, %v1270
          %v1416 = vmul.f32 %v1192, %v1275
          %v1417 = vmul.f32 %v1193, %v1280
          %v1418 = vmul.f32 %v1194, %v1285
          %v1419 = vmul.f32 %v1195, %v1290
          %v1420 = vmul.f32 %v1196, %v1295
          %v1421 = vmul.f32 %v1197, %v1300
          %v1422 = vmul.f32 %v1198, %v1305
          %v1423 = vmul.f32 %v1199, %v1310
          %v1424 = vmul.f32 %v1200, %v1315
          %v1425 = vmul.f32 %v1201, %v1320
          %v1426 = vmul.f32 %v1202, %v1325
          %v1427 = vmul.f32 %v1203, %v1330
          %v1428 = vmul.f32 %v1204, %v1335
          %v1429 = vmul.f32 %v1205, %v1340
          %v1430 = vmul.f32 %v1206, %v1345
          %v1431 = vmul.f32 %v1207, %v1350
          %v1432 = vmul.f32 %v1208, %v1355
          %v1433 = vmul.f32 %v1209, %v1360
          %v1434 = vmul.f32 %v1210, %v1365
          %v1435 = vmul.f32 %v1211, %v1370
          %v1436 = vmul.f32 %v1212, %v1375
          %v1437 = vmul.f32 %v1213, %v1380
          %v1438 = vmul.f32 %v1214, %v1385
          %v1439 = vmul.f32 %v1215, %v1390
          %v1440 = vmul.f32 %v1216, %v1395
          %v1441 = vmul.f32 %v1217, %v1400
          %v1442 = vmul.f32 %v1218, %v1405
          %v1443 = vmul.f32 %v1219, %v1410
          %v1444 = vpack.c.bf16 %v1413, %v1412
          %v1445 = vpack.c.bf16 %v1415, %v1414
          %v1446 = vpack.c.bf16 %v1417, %v1416
          %v1447 = vpack.c.bf16 %v1419, %v1418
          %v1448 = vpack.c.bf16 %v1421, %v1420
          %v1449 = vpack.c.bf16 %v1423, %v1422
          %v1450 = vpack.c.bf16 %v1425, %v1424
          %v1451 = vpack.c.bf16 %v1427, %v1426
          %v1452 = vpack.c.bf16 %v1429, %v1428
          %v1453 = vpack.c.bf16 %v1431, %v1430
          %v1454 = vpack.c.bf16 %v1433, %v1432
          %v1455 = vpack.c.bf16 %v1435, %v1434
          %v1456 = vpack.c.bf16 %v1437, %v1436
          %v1457 = vpack.c.bf16 %v1439, %v1438
          %v1458 = vpack.c.bf16 %v1441, %v1440
          %v1459 = vpack.c.bf16 %v1443, %v1442
          %v1460 = vld [vmem:[#allocation3] sm:$0xff]
          %v1461 = vld [vmem:[#allocation3 + $0x8] sm:$0xff]
          %v1462 = vld [vmem:[#allocation3 + $0x10] sm:$0xff]
          %v1463 = vld [vmem:[#allocation3 + $0x18] sm:$0xff]
          %v1464 = vld [vmem:[#allocation3 + $0x20] sm:$0xff]
          %v1465 = vld [vmem:[#allocation3 + $0x28] sm:$0xff]
          %v1466 = vld [vmem:[#allocation3 + $0x30] sm:$0xff]
          %v1467 = vld [vmem:[#allocation3 + $0x38] sm:$0xff]
          %v1468 = vld [vmem:[#allocation3 + $0x40] sm:$0xff]
          %v1469 = vld [vmem:[#allocation3 + $0x48] sm:$0xff]
          %v1470 = vld [vmem:[#allocation3 + $0x50] sm:$0xff]
          %v1471 = vld [vmem:[#allocation3 + $0x58] sm:$0xff]
          %v1472 = vld [vmem:[#allocation3 + $0x60] sm:$0xff]
          %v1473 = vld [vmem:[#allocation3 + $0x68] sm:$0xff]
          %v1474 = vld [vmem:[#allocation3 + $0x70] sm:$0xff]
          %v1475 = vld [vmem:[#allocation3 + $0x78] sm:$0xff]
          %v1476 = vld [vmem:[#allocation3 + $0x80] sm:$0xff]
          %v1477 = vld [vmem:[#allocation3 + $0x88] sm:$0xff]
          %v1478 = vld [vmem:[#allocation3 + $0x90] sm:$0xff]
          %v1479 = vld [vmem:[#allocation3 + $0x98] sm:$0xff]
          %v1480 = vld [vmem:[#allocation3 + $0xa0] sm:$0xff]
          %v1481 = vld [vmem:[#allocation3 + $0xa8] sm:$0xff]
          %v1482 = vld [vmem:[#allocation3 + $0xb0] sm:$0xff]
          %v1483 = vld [vmem:[#allocation3 + $0xb8] sm:$0xff]
          %v1484 = vld [vmem:[#allocation3 + $0xc0] sm:$0xff]
          %v1485 = vld [vmem:[#allocation3 + $0xc8] sm:$0xff]
          %v1486 = vld [vmem:[#allocation3 + $0xd0] sm:$0xff]
          %v1487 = vld [vmem:[#allocation3 + $0xd8] sm:$0xff]
          %v1488 = vld [vmem:[#allocation3 + $0xe0] sm:$0xff]
          %v1489 = vld [vmem:[#allocation3 + $0xe8] sm:$0xff]
          %v1490 = vld [vmem:[#allocation3 + $0xf0] sm:$0xff]
          %v1491 = vld [vmem:[#allocation3 + $0xf8] sm:$0xff]
          %v1492 = vld [vmem:[%s3] sm:$0xf]
          %v1493 = vld [vmem:[%s3 + $0x4] sm:$0xf]
          %v1494 = vld [vmem:[%s3 + $0x8] sm:$0xf]
          %v1495 = vld [vmem:[%s3 + $0xc] sm:$0xf]
          %v1496 = vld [vmem:[%s3 + $0x10] sm:$0xf]
          %v1497 = vld [vmem:[%s3 + $0x14] sm:$0xf]
          %v1498 = vld [vmem:[%s3 + $0x18] sm:$0xf]
          %v1499 = vld [vmem:[%s3 + $0x1c] sm:$0xf]
          %v1500 = vld [vmem:[%s3 + $0x20] sm:$0xf]
          %v1501 = vld [vmem:[%s3 + $0x24] sm:$0xf]
          %v1502 = vld [vmem:[%s3 + $0x28] sm:$0xf]
          %v1503 = vld [vmem:[%s3 + $0x2c] sm:$0xf]
          %v1504 = vld [vmem:[%s3 + $0x30] sm:$0xf]
          %v1505 = vld [vmem:[%s3 + $0x34] sm:$0xf]
          %v1506 = vld [vmem:[%s3 + $0x38] sm:$0xf]
          %v1507 = vld [vmem:[%s3 + $0x3c] sm:$0xf]
          %v1524 = vunpack.c.l.b16 %v1492
          %v1525 = vunpack.c.l.b16 %v1493
          %v1526 = vunpack.c.l.b16 %v1494
          %v1527 = vunpack.c.l.b16 %v1495
          %v1528 = vunpack.c.l.b16 %v1496
          %v1529 = vunpack.c.l.b16 %v1497
          %v1530 = vunpack.c.l.b16 %v1498
          %v1531 = vunpack.c.l.b16 %v1499
          %v1532 = vunpack.c.l.b16 %v1500
          %v1533 = vunpack.c.l.b16 %v1501
          %v1534 = vunpack.c.l.b16 %v1502
          %v1535 = vunpack.c.l.b16 %v1503
          %v1536 = vunpack.c.l.b16 %v1504
          %v1537 = vunpack.c.l.b16 %v1505
          %v1538 = vunpack.c.l.b16 %v1506
          %v1539 = vunpack.c.l.b16 %v1507
          %v1540 = vpack.c.b16 %v1525, %v1524
          %v1541 = vpack.c.b16 %v1527, %v1526
          %v1542 = vpack.c.b16 %v1529, %v1528
          %v1543 = vpack.c.b16 %v1531, %v1530
          %v1544 = vpack.c.b16 %v1533, %v1532
          %v1545 = vpack.c.b16 %v1535, %v1534
          %v1546 = vpack.c.b16 %v1537, %v1536
          %v1547 = vpack.c.b16 %v1539, %v1538
          %1556 = vmatprep.subr.bf16.mxu0 0
          %1557 = vmatpush1.bf16.msra.mxu0 %v1547
          %1558 = vmatprep.subr.bf16.mxu0 0
          %1559 = vmatpush1.bf16.msra.mxu0 %v1546
          %1560 = vmatprep.subr.bf16.mxu0 0
          %1561 = vmatpush1.bf16.msra.mxu0 %v1545
          %1562 = vmatprep.subr.bf16.mxu0 0
          %1563 = vmatpush1.bf16.msra.mxu0 %v1544
          %1564 = vmatprep.subr.bf16.mxu0 0
          %1565 = vmatpush1.bf16.msra.mxu0 %v1543
          %1566 = vmatprep.subr.bf16.mxu0 0
          %1567 = vmatpush1.bf16.msra.mxu0 %v1542
          %1568 = vmatprep.subr.bf16.mxu0 0
          %1569 = vmatpush1.bf16.msra.mxu0 %v1541
          %1570 = vmatprep.subr.bf16.mxu0 0
          %1571 = vmatpush1.bf16.msra.mxu0 %v1540
          %1572 = vmatprep.subr.bf16.mxu0 0
          %1573 = vmatpush2.bf16.msra.mxu0 0
          %1574 = vmatprep.subr.bf16.mxu0 0
          %1575 = vmatpush2.bf16.msra.mxu0 0
          %1576 = vmatprep.subr.bf16.mxu0 0
          %1577 = vmatpush2.bf16.msra.mxu0 0
          %1578 = vmatprep.subr.bf16.mxu0 0
          %1579 = vmatpush2.bf16.msra.mxu0 0
          %1580 = vmatprep.subr.bf16.mxu0 0
          %1581 = vmatpush2.bf16.msra.mxu0 0
          %1582 = vmatprep.subr.bf16.mxu0 0
          %1583 = vmatpush2.bf16.msra.mxu0 0
          %1584 = vmatprep.subr.bf16.mxu0 0
          %1585 = vmatpush2.bf16.msra.mxu0 0
          %1586 = vmatprep.subr.bf16.mxu0 0
          %1587 = vmatpush2.bf16.msra.mxu0 0
          %1588 = vmatprep.mubr.bf16.mxu0 0
          %1589 = vmatmul.mubr.bf16.gmra.mxu0 %v1444
          %v1590 = vpop.f32.mrf.mxu0
          %v1591 = vadd.f32 0.0, %v1590
          %v1592 = vpop.f32.mrf.mxu0
          %v1593 = vpop.f32.mrf.mxu0
          %v1594 = vadd.f32 0.0, %v1593
          %v1595 = vpop.f32.mrf.mxu0
          %1596 = vmatprep.mubr.bf16.mxu0 0
          %1597 = vmatmul.mubr.bf16.gmra.mxu0 %v1445
          %v1598 = vpop.f32.mrf.mxu0
          %v1599 = vadd.f32 0.0, %v1598
          %v1600 = vpop.f32.mrf.mxu0
          %v1601 = vpop.f32.mrf.mxu0
          %v1602 = vadd.f32 0.0, %v1601
          %v1603 = vpop.f32.mrf.mxu0
          %1604 = vmatprep.mubr.bf16.mxu0 0
          %1605 = vmatmul.mubr.bf16.gmra.mxu0 %v1446
          %v1606 = vpop.f32.mrf.mxu0
          %v1607 = vadd.f32 0.0, %v1606
          %v1608 = vpop.f32.mrf.mxu0
          %v1609 = vpop.f32.mrf.mxu0
          %v1610 = vadd.f32 0.0, %v1609
          %v1611 = vpop.f32.mrf.mxu0
          %1612 = vmatprep.mubr.bf16.mxu0 0
          %1613 = vmatmul.mubr.bf16.gmra.mxu0 %v1447
          %v1614 = vpop.f32.mrf.mxu0
          %v1615 = vadd.f32 0.0, %v1614
          %v1616 = vpop.f32.mrf.mxu0
          %v1617 = vpop.f32.mrf.mxu0
          %v1618 = vadd.f32 0.0, %v1617
          %v1619 = vpop.f32.mrf.mxu0
          %1620 = vmatprep.mubr.bf16.mxu0 0
          %1621 = vmatmul.mubr.bf16.gmra.mxu0 %v1448
          %v1622 = vpop.f32.mrf.mxu0
          %v1623 = vadd.f32 0.0, %v1622
          %v1624 = vpop.f32.mrf.mxu0
          %v1625 = vpop.f32.mrf.mxu0
          %v1626 = vadd.f32 0.0, %v1625
          %v1627 = vpop.f32.mrf.mxu0
          %1628 = vmatprep.mubr.bf16.mxu0 0
          %1629 = vmatmul.mubr.bf16.gmra.mxu0 %v1449
          %v1630 = vpop.f32.mrf.mxu0
          %v1631 = vadd.f32 0.0, %v1630
          %v1632 = vpop.f32.mrf.mxu0
          %v1633 = vpop.f32.mrf.mxu0
          %v1634 = vadd.f32 0.0, %v1633
          %v1635 = vpop.f32.mrf.mxu0
          %1636 = vmatprep.mubr.bf16.mxu0 0
          %1637 = vmatmul.mubr.bf16.gmra.mxu0 %v1450
          %v1638 = vpop.f32.mrf.mxu0
          %v1639 = vadd.f32 0.0, %v1638
          %v1640 = vpop.f32.mrf.mxu0
          %v1641 = vpop.f32.mrf.mxu0
          %v1642 = vadd.f32 0.0, %v1641
          %v1643 = vpop.f32.mrf.mxu0
          %1644 = vmatprep.mubr.bf16.mxu0 0
          %1645 = vmatmul.mubr.bf16.gmra.mxu0 %v1451
          %v1646 = vpop.f32.mrf.mxu0
          %v1647 = vadd.f32 0.0, %v1646
          %v1648 = vpop.f32.mrf.mxu0
          %v1649 = vpop.f32.mrf.mxu0
          %v1650 = vadd.f32 0.0, %v1649
          %v1651 = vpop.f32.mrf.mxu0
          %1652 = vmatprep.mubr.bf16.mxu0 0
          %1653 = vmatmul.mubr.bf16.gmra.mxu0 %v1452
          %v1654 = vpop.f32.mrf.mxu0
          %v1655 = vadd.f32 0.0, %v1654
          %v1656 = vpop.f32.mrf.mxu0
          %v1657 = vpop.f32.mrf.mxu0
          %v1658 = vadd.f32 0.0, %v1657
          %v1659 = vpop.f32.mrf.mxu0
          %1660 = vmatprep.mubr.bf16.mxu0 0
          %1661 = vmatmul.mubr.bf16.gmra.mxu0 %v1453
          %v1662 = vpop.f32.mrf.mxu0
          %v1663 = vadd.f32 0.0, %v1662
          %v1664 = vpop.f32.mrf.mxu0
          %v1665 = vpop.f32.mrf.mxu0
          %v1666 = vadd.f32 0.0, %v1665
          %v1667 = vpop.f32.mrf.mxu0
          %1668 = vmatprep.mubr.bf16.mxu0 0
          %1669 = vmatmul.mubr.bf16.gmra.mxu0 %v1454
          %v1670 = vpop.f32.mrf.mxu0
          %v1671 = vadd.f32 0.0, %v1670
          %v1672 = vpop.f32.mrf.mxu0
          %v1673 = vpop.f32.mrf.mxu0
          %v1674 = vadd.f32 0.0, %v1673
          %v1675 = vpop.f32.mrf.mxu0
          %1676 = vmatprep.mubr.bf16.mxu0 0
          %1677 = vmatmul.mubr.bf16.gmra.mxu0 %v1455
          %v1678 = vpop.f32.mrf.mxu0
          %v1679 = vadd.f32 0.0, %v1678
          %v1680 = vpop.f32.mrf.mxu0
          %v1681 = vpop.f32.mrf.mxu0
          %v1682 = vadd.f32 0.0, %v1681
          %v1683 = vpop.f32.mrf.mxu0
          %1684 = vmatprep.mubr.bf16.mxu0 0
          %1685 = vmatmul.mubr.bf16.gmra.mxu0 %v1456
          %v1686 = vpop.f32.mrf.mxu0
          %v1687 = vadd.f32 0.0, %v1686
          %v1688 = vpop.f32.mrf.mxu0
          %v1689 = vpop.f32.mrf.mxu0
          %v1690 = vadd.f32 0.0, %v1689
          %v1691 = vpop.f32.mrf.mxu0
          %1692 = vmatprep.mubr.bf16.mxu0 0
          %1693 = vmatmul.mubr.bf16.gmra.mxu0 %v1457
          %v1694 = vpop.f32.mrf.mxu0
          %v1695 = vadd.f32 0.0, %v1694
          %v1696 = vpop.f32.mrf.mxu0
          %v1697 = vpop.f32.mrf.mxu0
          %v1698 = vadd.f32 0.0, %v1697
          %v1699 = vpop.f32.mrf.mxu0
          %1700 = vmatprep.mubr.bf16.mxu0 0
          %1701 = vmatmul.mubr.bf16.gmra.mxu0 %v1458
          %v1702 = vpop.f32.mrf.mxu0
          %v1703 = vadd.f32 0.0, %v1702
          %v1704 = vpop.f32.mrf.mxu0
          %v1705 = vpop.f32.mrf.mxu0
          %v1706 = vadd.f32 0.0, %v1705
          %v1707 = vpop.f32.mrf.mxu0
          %1708 = vmatprep.mubr.bf16.mxu0 0
          %1709 = vmatmul.mubr.bf16.gmra.mxu0 %v1459
          %v1710 = vpop.f32.mrf.mxu0
          %v1711 = vadd.f32 0.0, %v1710
          %v1712 = vpop.f32.mrf.mxu0
          %v1713 = vpop.f32.mrf.mxu0
          %v1714 = vadd.f32 0.0, %v1713
          %v1715 = vpop.f32.mrf.mxu0
          %1716 = vdwg.mxu0
          %v1717 = vadd.f32 %v1460, %v1591
          %v1718 = vadd.f32 %v1461, %v1594
          %v1719 = vadd.f32 %v1462, %v1599
          %v1720 = vadd.f32 %v1463, %v1602
          %v1721 = vadd.f32 %v1464, %v1607
          %v1722 = vadd.f32 %v1465, %v1610
          %v1723 = vadd.f32 %v1466, %v1615
          %v1724 = vadd.f32 %v1467, %v1618
          %v1725 = vadd.f32 %v1468, %v1623
          %v1726 = vadd.f32 %v1469, %v1626
          %v1727 = vadd.f32 %v1470, %v1631
          %v1728 = vadd.f32 %v1471, %v1634
          %v1729 = vadd.f32 %v1472, %v1639
          %v1730 = vadd.f32 %v1473, %v1642
          %v1731 = vadd.f32 %v1474, %v1647
          %v1732 = vadd.f32 %v1475, %v1650
          %v1733 = vadd.f32 %v1476, %v1655
          %v1734 = vadd.f32 %v1477, %v1658
          %v1735 = vadd.f32 %v1478, %v1663
          %v1736 = vadd.f32 %v1479, %v1666
          %v1737 = vadd.f32 %v1480, %v1671
          %v1738 = vadd.f32 %v1481, %v1674
          %v1739 = vadd.f32 %v1482, %v1679
          %v1740 = vadd.f32 %v1483, %v1682
          %v1741 = vadd.f32 %v1484, %v1687
          %v1742 = vadd.f32 %v1485, %v1690
          %v1743 = vadd.f32 %v1486, %v1695
          %v1744 = vadd.f32 %v1487, %v1698
          %v1745 = vadd.f32 %v1488, %v1703
          %v1746 = vadd.f32 %v1489, %v1706
          %v1747 = vadd.f32 %v1490, %v1711
          %v1748 = vadd.f32 %v1491, %v1714
          %v1749 = vmax.f32 %v1717, 0.0
          %v1750 = vmax.f32 %v1718, 0.0
          %v1751 = vmax.f32 %v1719, 0.0
          %v1752 = vmax.f32 %v1720, 0.0
          %v1753 = vmax.f32 %v1721, 0.0
          %v1754 = vmax.f32 %v1722, 0.0
          %v1755 = vmax.f32 %v1723, 0.0
          %v1756 = vmax.f32 %v1724, 0.0
          %v1757 = vmax.f32 %v1725, 0.0
          %v1758 = vmax.f32 %v1726, 0.0
          %v1759 = vmax.f32 %v1727, 0.0
          %v1760 = vmax.f32 %v1728, 0.0
          %v1761 = vmax.f32 %v1729, 0.0
          %v1762 = vmax.f32 %v1730, 0.0
          %v1763 = vmax.f32 %v1731, 0.0
          %v1764 = vmax.f32 %v1732, 0.0
          %v1765 = vmax.f32 %v1733, 0.0
          %v1766 = vmax.f32 %v1734, 0.0
          %v1767 = vmax.f32 %v1735, 0.0
          %v1768 = vmax.f32 %v1736, 0.0
          %v1769 = vmax.f32 %v1737, 0.0
          %v1770 = vmax.f32 %v1738, 0.0
          %v1771 = vmax.f32 %v1739, 0.0
          %v1772 = vmax.f32 %v1740, 0.0
          %v1773 = vmax.f32 %v1741, 0.0
          %v1774 = vmax.f32 %v1742, 0.0
          %v1775 = vmax.f32 %v1743, 0.0
          %v1776 = vmax.f32 %v1744, 0.0
          %v1777 = vmax.f32 %v1745, 0.0
          %v1778 = vmax.f32 %v1746, 0.0
          %v1779 = vmax.f32 %v1747, 0.0
          %v1780 = vmax.f32 %v1748, 0.0
          %v1781 = vpack.c.bf16 %v1750, %v1749
          %v1782 = vpack.c.bf16 %v1752, %v1751
          %v1783 = vpack.c.bf16 %v1754, %v1753
          %v1784 = vpack.c.bf16 %v1756, %v1755
          %v1785 = vpack.c.bf16 %v1758, %v1757
          %v1786 = vpack.c.bf16 %v1760, %v1759
          %v1787 = vpack.c.bf16 %v1762, %v1761
          %v1788 = vpack.c.bf16 %v1764, %v1763
          %v1789 = vpack.c.bf16 %v1766, %v1765
          %v1790 = vpack.c.bf16 %v1768, %v1767
          %v1791 = vpack.c.bf16 %v1770, %v1769
          %v1792 = vpack.c.bf16 %v1772, %v1771
          %v1793 = vpack.c.bf16 %v1774, %v1773
          %v1794 = vpack.c.bf16 %v1776, %v1775
          %v1795 = vpack.c.bf16 %v1778, %v1777
          %v1796 = vpack.c.bf16 %v1780, %v1779
          %v1813 = vunpack.c.l.b16 %v1781
          %v1814 = vunpack.c.h.b16 %v1781
          %v1815 = vunpack.c.l.b16 %v1782
          %v1816 = vunpack.c.h.b16 %v1782
          %v1817 = vunpack.c.l.b16 %v1783
          %v1818 = vunpack.c.h.b16 %v1783
          %v1819 = vunpack.c.l.b16 %v1784
          %v1820 = vunpack.c.h.b16 %v1784
          %v1821 = vunpack.c.l.b16 %v1785
          %v1822 = vunpack.c.h.b16 %v1785
          %v1823 = vunpack.c.l.b16 %v1786
          %v1824 = vunpack.c.h.b16 %v1786
          %v1825 = vunpack.c.l.b16 %v1787
          %v1826 = vunpack.c.h.b16 %v1787
          %v1827 = vunpack.c.l.b16 %v1788
          %v1828 = vunpack.c.h.b16 %v1788
          %v1829 = vunpack.c.l.b16 %v1789
          %v1830 = vunpack.c.h.b16 %v1789
          %v1831 = vunpack.c.l.b16 %v1790
          %v1832 = vunpack.c.h.b16 %v1790
          %v1833 = vunpack.c.l.b16 %v1791
          %v1834 = vunpack.c.h.b16 %v1791
          %v1835 = vunpack.c.l.b16 %v1792
          %v1836 = vunpack.c.h.b16 %v1792
          %v1837 = vunpack.c.l.b16 %v1793
          %v1838 = vunpack.c.h.b16 %v1793
          %v1839 = vunpack.c.l.b16 %v1794
          %v1840 = vunpack.c.h.b16 %v1794
          %v1841 = vunpack.c.l.b16 %v1795
          %v1842 = vunpack.c.h.b16 %v1795
          %v1843 = vunpack.c.l.b16 %v1796
          %v1844 = vunpack.c.h.b16 %v1796
          %v1845 = vpack.c.b16 %v1813, %v1813
          %v1846 = vpack.c.b16 %v1814, %v1814
          %v1847 = vpack.c.b16 %v1815, %v1815
          %v1848 = vpack.c.b16 %v1816, %v1816
          %v1849 = vpack.c.b16 %v1817, %v1817
          %v1850 = vpack.c.b16 %v1818, %v1818
          %v1851 = vpack.c.b16 %v1819, %v1819
          %v1852 = vpack.c.b16 %v1820, %v1820
          %v1853 = vpack.c.b16 %v1821, %v1821
          %v1854 = vpack.c.b16 %v1822, %v1822
          %v1855 = vpack.c.b16 %v1823, %v1823
          %v1856 = vpack.c.b16 %v1824, %v1824
          %v1857 = vpack.c.b16 %v1825, %v1825
          %v1858 = vpack.c.b16 %v1826, %v1826
          %v1859 = vpack.c.b16 %v1827, %v1827
          %v1860 = vpack.c.b16 %v1828, %v1828
          %v1861 = vpack.c.b16 %v1829, %v1829
          %v1862 = vpack.c.b16 %v1830, %v1830
          %v1863 = vpack.c.b16 %v1831, %v1831
          %v1864 = vpack.c.b16 %v1832, %v1832
          %v1865 = vpack.c.b16 %v1833, %v1833
          %v1866 = vpack.c.b16 %v1834, %v1834
          %v1867 = vpack.c.b16 %v1835, %v1835
          %v1868 = vpack.c.b16 %v1836, %v1836
          %v1869 = vpack.c.b16 %v1837, %v1837
          %v1870 = vpack.c.b16 %v1838, %v1838
          %v1871 = vpack.c.b16 %v1839, %v1839
          %v1872 = vpack.c.b16 %v1840, %v1840
          %v1873 = vpack.c.b16 %v1841, %v1841
          %v1874 = vpack.c.b16 %v1842, %v1842
          %v1875 = vpack.c.b16 %v1843, %v1843
          %v1876 = vpack.c.b16 %v1844, %v1844
          %1909 = vst [vmem:[%s302] sm:$0xf] %v1845
          %1910 = vst [vmem:[%s302 + $0x4] sm:$0xf] %v1846
          %1911 = vst [vmem:[%s302 + $0x8] sm:$0xf] %v1847
          %1912 = vst [vmem:[%s302 + $0xc] sm:$0xf] %v1848
          %1913 = vst [vmem:[%s302 + $0x10] sm:$0xf] %v1849
          %1914 = vst [vmem:[%s302 + $0x14] sm:$0xf] %v1850
          %1915 = vst [vmem:[%s302 + $0x18] sm:$0xf] %v1851
          %1916 = vst [vmem:[%s302 + $0x1c] sm:$0xf] %v1852
          %1917 = vst [vmem:[%s302 + $0x20] sm:$0xf] %v1853
          %1918 = vst [vmem:[%s302 + $0x24] sm:$0xf] %v1854
          %1919 = vst [vmem:[%s302 + $0x28] sm:$0xf] %v1855
          %1920 = vst [vmem:[%s302 + $0x2c] sm:$0xf] %v1856
          %1921 = vst [vmem:[%s302 + $0x30] sm:$0xf] %v1857
          %1922 = vst [vmem:[%s302 + $0x34] sm:$0xf] %v1858
          %1923 = vst [vmem:[%s302 + $0x38] sm:$0xf] %v1859
          %1924 = vst [vmem:[%s302 + $0x3c] sm:$0xf] %v1860
          %1925 = vst [vmem:[%s302 + $0x40] sm:$0xf] %v1861
          %1926 = vst [vmem:[%s302 + $0x44] sm:$0xf] %v1862
          %1927 = vst [vmem:[%s302 + $0x48] sm:$0xf] %v1863
          %1928 = vst [vmem:[%s302 + $0x4c] sm:$0xf] %v1864
          %1929 = vst [vmem:[%s302 + $0x50] sm:$0xf] %v1865
          %1930 = vst [vmem:[%s302 + $0x54] sm:$0xf] %v1866
          %1931 = vst [vmem:[%s302 + $0x58] sm:$0xf] %v1867
          %1932 = vst [vmem:[%s302 + $0x5c] sm:$0xf] %v1868
          %1933 = vst [vmem:[%s302 + $0x60] sm:$0xf] %v1869
          %1934 = vst [vmem:[%s302 + $0x64] sm:$0xf] %v1870
          %1935 = vst [vmem:[%s302 + $0x68] sm:$0xf] %v1871
          %1936 = vst [vmem:[%s302 + $0x6c] sm:$0xf] %v1872
          %1937 = vst [vmem:[%s302 + $0x70] sm:$0xf] %v1873
          %1938 = vst [vmem:[%s302 + $0x74] sm:$0xf] %v1874
          %1939 = vst [vmem:[%s302 + $0x78] sm:$0xf] %v1875
          %1940 = vst [vmem:[%s302 + $0x7c] sm:$0xf] %v1876
        $region56: #{tpu_custom_call.1} parent=43 // pred_fallthru
          _
        %s1941 = sand.u32 %s181, 1
        %s1942 = scalar_lea.sflag [#allocation6], %s1941
        %s1943 = sand.u32 %s181, 1
        %s1944 = smul.addr %s1943, 128
        %s1945 = scalar_lea.vmem [#allocation7], %s1944
        // Predicated region
        $region57: #{tpu_custom_call.1} parent=43 // pred_check
          %p1946 = pneg %p191
        $region58: #{tpu_custom_call.1} parent=43 // pred_check_branch
          %1948 = sbr.rel (%p1946) target = $region60
        $region59: #{tpu_custom_call.1} parent=43 // pred_region
          %s1949 = smul.u32 32, %s27
          %s1951 = ssub.s32 2048, 2048
          %1952 = vsyncadd %s1942, %s1951
          %s1953 = smul.addr %s1949, 64
          %s1954 = scalar_lea.hbm %s6, %s1953
          %s1955 = sshll.u32 %s1945, 4
          %s1956 = int_to_ptr.vmem [resolvable:$true] %s1955
          %1961 = dma.vmem_to_hbm [thread:$0]  %s1956, 2048, %s1954, %s1942, 64, 64, 4
        $region60: #{tpu_custom_call.1} parent=43 // pred_fallthru
          _
      $region44: #{tpu_custom_call.1} parent=5 // pred_fallthru
        _
      %p1962 = scmp.le.s32.totalorder 2, %s18
      // Predicated region
      $region61: #{tpu_custom_call.1} parent=5 // pred_check
        %p1963 = pneg %p1962
      $region62: #{tpu_custom_call.1} parent=5 // pred_check_branch
        %1965 = sbr.rel (%p1963) target = $region64
      $region63: #{tpu_custom_call.1} parent=5 // pred_region
        %s1966 = ssub.s32 %s18, 2
        // Predicated region
        $region65: #{tpu_custom_call.1} parent=63 // pred_check
          %p1967 = pneg %p197
        $region66: #{tpu_custom_call.1} parent=63 // pred_check_branch
          %1969 = sbr.rel (%p1967) target = $region68
        $region67: #{tpu_custom_call.1} parent=63 // pred_region
          %s1970 = sand.u32 %s182, 1
          %s1971 = scalar_lea.sflag [#allocation6], %s1970
          %s1972 = sand.u32 %s182, 1
          %s1973 = smul.addr %s1972, 128
          %s1974 = scalar_lea.vmem [#allocation7], %s1973
          %1975 = dma.done %s1971, 2048
        $region68: #{tpu_custom_call.1} parent=63 // pred_fallthru
          _
      $region64: #{tpu_custom_call.1} parent=5 // pred_fallthru
        _
    $region6: #{tpu_custom_call.1} parent=1 // loop_footer
      %s22 = sadd.s32 1, %s18
    $region7: #{tpu_custom_call.1} parent=1 // loop_footer_branch
      %17 = sbr.rel target = $region3
    $region8: #{tpu_custom_call.1} parent=1 // loop_exit
      _
    %1976 = vsyncpa [#allocation5], 1
    %s1977 = scalar_lea.sflag [#allocation5], 1
    %1978 = vsyncpa %s1977, 1
    %1979 = vsyncpa [#allocation6], 1
    %s1980 = scalar_lea.sflag [#allocation6], 1
    %1981 = vsyncpa %s1980, 1

</llo_original>
